<compile_context>
chip_gen: v5e
topology: v5e:2x2
jax: 0.10.0
libtpu: 0.0.40
codegen_flags: <defaults>
</compile_context>

<pallas_src>
import functools

import jax
import jax.numpy as jnp
from jax import lax
from jax.experimental import pallas as pl
from jax.experimental.pallas import tpu as pltpu

EPS = 1e-8  # nn.CosineSimilarity default eps

# Tile caps (f32): att tile <= 512*512*4 B = 1 MiB per buffer; double-buffered
# working set stays well under the scoped-VMEM default on every generation.
_TQ_TILE_MAX = 512
_TY_TILE_MAX = 512


def _round_up(x, m):
    return ((x + m - 1) // m) * m


def _att_cosine_kernel(q_ref, y_ref, yn_ref, att_ref, sim_ref, qn_ref, acc_ref,
                       *, ty_tile, ty_valid, needs_mask):
    ki = pl.program_id(2)
    nk = pl.num_programs(2)

    q = q_ref[0].astype(jnp.float32)      # (tq, D)
    yv = y_ref[0].astype(jnp.float32)     # (ty, D)
    y_norm = yn_ref[0]                    # (1, ty), f32, precomputed per ty-tile

    # q row norms are constant across the (innermost, sequential) Ty axis:
    # compute once per (b, Tq-tile) and cache; also (re)init the running max.
    @pl.when(ki == 0)
    def _():
        qn_ref[...] = jnp.sqrt(jnp.sum(q * q, axis=-1, keepdims=True))  # (tq,1)
        acc_ref[...] = jnp.full_like(acc_ref, -jnp.inf)                 # (1,tq)

    q_norm = qn_ref[...]                  # (tq, 1)

    # Pairwise dot products on the MXU: contract last dim of both operands
    # directly (no explicit transpose of the y tile).
    dots = lax.dot_general(
        q, yv,
        dimension_numbers=(((1,), (1,)), ((), ())),
        preferred_element_type=jnp.float32)                             # (tq, ty)

    # cos = dot / max(||q||*||y||, eps); the divide becomes an EUP reciprocal.
    denom = jnp.maximum(q_norm * y_norm, EPS)                           # (tq, ty)
    att = dots * pl.reciprocal(denom, approx=True)

    att_ref[...] = att[None].astype(att_ref.dtype)                      # (1,tq,ty)

    # Running max over Ty for sim; exclude padded Ty columns.
    if needs_mask:
        col = ki * ty_tile + lax.broadcasted_iota(jnp.int32, att.shape, 1)
        att_m = jnp.where(col < ty_valid, att, -jnp.inf)
    else:
        att_m = att
    tile_max = jnp.max(att_m, axis=1)                                   # (tq,)
    acc_ref[...] = jnp.maximum(acc_ref[...], tile_max[None, :])

    @pl.when(ki == nk - 1)
    def _():
        sim_ref[...] = acc_ref[...][None].astype(sim_ref.dtype)         # (1,1,tq)


def att_cosine(query, y, *, tq_max=_TQ_TILE_MAX, ty_max=_TY_TILE_MAX):
    """query: (B, Tq, D), y: (B, Ty, D) -> att (B, Tq, Ty), sim (B, 1, Tq)."""
    B, Tq, D = query.shape
    By, Ty, Dy = y.shape
    assert B == By and D == Dy
    dtype = query.dtype

    # MXU/lane-friendly tiles: multiples of 128.
    tq_max = max(128, (int(tq_max) // 128) * 128)
    ty_max = max(128, (int(ty_max) // 128) * 128)
    tq = min(tq_max, _round_up(Tq, 128))
    ty = min(ty_max, _round_up(Ty, 128))
    Tq_p = _round_up(_round_up(Tq, 128), tq)
    Ty_p = _round_up(_round_up(Ty, 128), ty)
    nq, nk = Tq_p // tq, Ty_p // ty

    qp = query if Tq_p == Tq else jnp.pad(query, ((0, 0), (0, Tq_p - Tq), (0, 0)))
    yp = y if Ty_p == Ty else jnp.pad(y, ((0, 0), (0, Ty_p - Ty), (0, 0)))

    # y row norms computed once and reused by every Tq tile (tiny, lane-dense).
    y_norm = jnp.sqrt(jnp.sum(jnp.square(yp.astype(jnp.float32)), axis=-1,
                              keepdims=True))                 # (B, Ty_p, 1)
    y_norm = jnp.transpose(y_norm, (0, 2, 1))                 # (B, 1, Ty_p)

    kernel = functools.partial(_att_cosine_kernel, ty_tile=ty, ty_valid=Ty,
                               needs_mask=(Ty_p != Ty))

    grid_spec = pltpu.PrefetchScalarGridSpec(
        num_scalar_prefetch=0,
        grid=(B, nq, nk),
        in_specs=[
            pl.BlockSpec((1, tq, D), lambda b, qi, ki: (b, qi, 0)),
            pl.BlockSpec((1, ty, D), lambda b, qi, ki: (b, ki, 0)),
            pl.BlockSpec((1, 1, ty), lambda b, qi, ki: (b, 0, ki)),
        ],
        out_specs=[
            pl.BlockSpec((1, tq, ty), lambda b, qi, ki: (b, qi, ki)),
            pl.BlockSpec((1, 1, tq), lambda b, qi, ki: (b, 0, qi)),
        ],
        scratch_shapes=[
            pltpu.VMEM((tq, 1), jnp.float32),   # cached q row norms
            pltpu.VMEM((1, tq), jnp.float32),   # running max for sim (lane-dense)
        ],
    )

    itemsize = int(jnp.dtype(dtype).itemsize)
    cost = pl.CostEstimate(
        flops=int(2 * B * Tq_p * Ty_p * D),
        transcendentals=int(B * Tq_p * (1 + Ty_p)),
        bytes_accessed=int(itemsize * B * (nq * Ty_p * D + Tq_p * D
                                           + Tq_p * Ty_p + Tq_p)
                           + 4 * B * nq * Ty_p),
    )

    att, sim = pl.pallas_call(
        kernel,
        out_shape=(
            jax.ShapeDtypeStruct((B, Tq_p, Ty_p), dtype),
            jax.ShapeDtypeStruct((B, 1, Tq_p), dtype),
        ),
        grid_spec=grid_spec,
        compiler_params=pltpu.CompilerParams(
            dimension_semantics=("parallel", "parallel", "arbitrary")),
        cost_estimate=cost,
    )(qp, yp, y_norm)

    if Tq_p != Tq or Ty_p != Ty:
        att = att[:, :Tq, :Ty]
        sim = sim[:, :, :Tq]
    return att, sim


def alignment_cosine_soft(query, y, n_wins_y):
    """Full Alignment(att_method='cosine', apply_att_method='soft') forward."""
    att, _sim = att_cosine(query, y)
    Ty = y.shape[1]
    # TODO(synk): the mask -> softmax -> bmm apply below is plain XLA; it could
    # be fused into the Pallas kernel (online softmax over Ty tiles) to avoid
    # materializing att in HBM when only the aligned y is needed downstream.
    valid = jnp.arange(Ty)[None, :] < n_wins_y[:, None].astype(jnp.int32)  # (B,Ty)
    att = jnp.where(valid[:, None, :], att, -jnp.inf)
    att = jax.nn.softmax(att, axis=2)
    return jnp.einsum('bqk,bkd->bqd', att, y)


# ----------------------------- pure-JAX references -----------------------------

def att_cosine_ref(query, y):
    q = query[:, :, None, :].astype(jnp.float32)
    yv = y[:, None, :, :].astype(jnp.float32)
    dots = jnp.sum(q * yv, axis=-1)
    qn = jnp.sqrt(jnp.sum(q * q, axis=-1))
    yn = jnp.sqrt(jnp.sum(yv * yv, axis=-1))
    att = dots / jnp.maximum(qn * yn, EPS)
    sim = jnp.max(att, axis=2)[:, None, :]
    return att.astype(query.dtype), sim.astype(query.dtype)


def alignment_cosine_soft_ref(query, y, n_wins_y):
    att, _ = att_cosine_ref(query, y)
    valid = jnp.arange(y.shape[1])[None, :] < n_wins_y[:, None].astype(jnp.int32)
    att = jnp.where(valid[:, None, :], att, -jnp.inf)
    att = jax.nn.softmax(att, axis=2)
    return jnp.einsum('bqk,bkd->bqd', att, y)


if __name__ == "__main__":
    key = jax.random.PRNGKey(0)
    kq, ky, k1, k2 = jax.random.split(key, 4)

    # Small NISQA-like shapes: (batch, frames, feature_dim).
    B, Tq, Ty, D = 2, 8, 16, 32
    query = jax.random.normal(kq, (B, Tq, D), dtype=jnp.float32)
    y = jax.random.normal(ky, (B, Ty, D), dtype=jnp.float32)
    n_wins_y = jnp.array([16, 12], dtype=jnp.int32)

    att, sim = att_cosine(query, y)
    jax.block_until_ready((att, sim))
    att_r, sim_r = att_cosine_ref(query, y)
    assert att.shape == (B, Tq, Ty) and sim.shape == (B, 1, Tq)
    assert jnp.allclose(att, att_r, atol=5e-3, rtol=5e-3)
    assert jnp.allclose(sim, sim_r, atol=5e-3, rtol=5e-3)

    # Full Alignment forward (cosine attention + masking + softmax + soft apply).
    out = alignment_cosine_soft(query, y, n_wins_y)
    jax.block_until_ready(out)
    out_r = alignment_cosine_soft_ref(query, y, n_wins_y)
    assert out.shape == (B, Tq, D)
    assert jnp.allclose(out, out_r, atol=2e-2, rtol=1e-2)

    # Exercise the tiled path: multiple Tq/Ty tiles, ragged padding + masking.
    B2, Tq2, Ty2 = 2, 200, 300
    q2 = jax.random.normal(k1, (B2, Tq2, D), dtype=jnp.float32)
    y2 = jax.random.normal(k2, (B2, Ty2, D), dtype=jnp.float32)
    att2, sim2 = att_cosine(q2, y2, tq_max=128, ty_max=128)
    jax.block_until_ready((att2, sim2))
    att2_r, sim2_r = att_cosine_ref(q2, y2)
    assert jnp.allclose(att2, att2_r, atol=5e-3, rtol=5e-3)
    assert jnp.allclose(sim2, sim2_r, atol=5e-3, rtol=5e-3)

    print("KERNEL_OK")
</pallas_src>

<mosaic_0001>
module attributes {stable_mosaic.version = 11 : i64} {
  func.func @_att_cosine_kernel(%arg0: i32, %arg1: i32, %arg2: i32, %arg3: memref<1x128x32xf32, #tpu.memory_space<vmem>>, %arg4: memref<1x128x32xf32, #tpu.memory_space<vmem>>, %arg5: memref<1x1x128xf32, #tpu.memory_space<vmem>>, %arg6: memref<1x128x128xf32, #tpu.memory_space<vmem>>, %arg7: memref<1x1x128xf32, #tpu.memory_space<vmem>>, %arg8: memref<128x1xf32, #tpu.memory_space<vmem>>, %arg9: memref<1x128xf32, #tpu.memory_space<vmem>>) attributes {dimension_semantics = [#tpu.dimension_semantics<parallel>, #tpu.dimension_semantics<parallel>, #tpu.dimension_semantics<arbitrary>], iteration_bounds = array<i64: 2, 1, 1>, scalar_prefetch = 0 : i64, scratch_operands = 2 : i64, tpu.core_type = #tpu.core_type<tc>, window_params = [{transform_indices = @transform_0, window_bounds = array<i64: 1, 128, 32>}, {transform_indices = @transform_1, window_bounds = array<i64: 1, 128, 32>}, {transform_indices = @transform_2, window_bounds = array<i64: 1, 1, 128>}, {transform_indices = @transform_3, window_bounds = array<i64: 1, 128, 128>}, {transform_indices = @transform_4, window_bounds = array<i64: 1, 1, 128>}]} {
    %c0 = arith.constant 0 : index
    %c0_0 = arith.constant 0 : index
    %c0_1 = arith.constant 0 : index
    %0 = vector.load %arg3[%c0, %c0_0, %c0_1] : memref<1x128x32xf32, #tpu.memory_space<vmem>>, vector<1x128x32xf32>
    %1 = vector.shape_cast %0 : vector<1x128x32xf32> to vector<128x32xf32>
    %c0_2 = arith.constant 0 : index
    %c0_3 = arith.constant 0 : index
    %c0_4 = arith.constant 0 : index
    %2 = vector.load %arg4[%c0_2, %c0_3, %c0_4] : memref<1x128x32xf32, #tpu.memory_space<vmem>>, vector<1x128x32xf32>
    %3 = vector.shape_cast %2 : vector<1x128x32xf32> to vector<128x32xf32>
    %c0_5 = arith.constant 0 : index
    %c0_6 = arith.constant 0 : index
    %c0_7 = arith.constant 0 : index
    %4 = vector.load %arg5[%c0_5, %c0_6, %c0_7] : memref<1x1x128xf32, #tpu.memory_space<vmem>>, vector<1x1x128xf32>
    %5 = vector.shape_cast %4 : vector<1x1x128xf32> to vector<1x128xf32>
    %c0_i32 = arith.constant 0 : i32
    %6 = arith.cmpi eq, %arg2, %c0_i32 : i32
    %7 = arith.extui %6 : i1 to i32
    %c0_i32_8 = arith.constant 0 : i32
    %8 = arith.cmpi ne, %7, %c0_i32_8 : i32
    scf.if %8 {
      %36 = arith.mulf %1, %1 : vector<128x32xf32>
      %cst_23 = arith.constant dense<0.000000e+00> : vector<128xf32>
      %37 = vector.multi_reduction <add>, %36, %cst_23 [1] : vector<128x32xf32> to vector<128xf32>
      %38 = vector.shape_cast %37 : vector<128xf32> to vector<128x1xf32>
      %39 = math.sqrt %38 : vector<128x1xf32>
      %c0_24 = arith.constant 0 : index
      %c0_25 = arith.constant 0 : index
      %40 = vector.load %arg8[%c0_24, %c0_25] : memref<128x1xf32, #tpu.memory_space<vmem>>, vector<128x1xf32>
      tpu.vector_store %arg8[%c0_24, %c0_25], %39 {strides = array<i32>} : memref<128x1xf32, #tpu.memory_space<vmem>>, vector<128x1xf32>,
      %cst_26 = arith.constant 0xFF800000 : f32
      %41 = vector.broadcast %cst_26 : f32 to vector<1x128xf32>
      %c0_27 = arith.constant 0 : index
      %c0_28 = arith.constant 0 : index
      %42 = vector.load %arg9[%c0_27, %c0_28] : memref<1x128xf32, #tpu.memory_space<vmem>>, vector<1x128xf32>
      tpu.vector_store %arg9[%c0_27, %c0_28], %41 {strides = array<i32>} : memref<1x128xf32, #tpu.memory_space<vmem>>, vector<1x128xf32>,
    } else {
    }
    %c0_9 = arith.constant 0 : index
    %c0_10 = arith.constant 0 : index
    %9 = vector.load %arg8[%c0_9, %c0_10] : memref<128x1xf32, #tpu.memory_space<vmem>>, vector<128x1xf32>
    %cst = arith.constant dense<0.000000e+00> : vector<128x128xf32>
    %10 = tpu.matmul %1, %3, %cst {dimension_numbers = #tpu.dot_dimension_numbers<[1], [1], [0], [0], [0, 0, 1, 0], [], []>} : vector<128x32xf32>, vector<128x32xf32>, vector<128x128xf32> -> vector<128x128xf32>
    %11 = vector.broadcast %9 : vector<128x1xf32> to vector<128x128xf32>
    %12 = vector.broadcast %5 : vector<1x128xf32> to vector<128x128xf32>
    %13 = arith.mulf %11, %12 : vector<128x128xf32>
    %cst_11 = arith.constant 9.99999993E-9 : f32
    %14 = vector.broadcast %cst_11 : f32 to vector<128x128xf32>
    %15 = arith.maximumf %13, %14 : vector<128x128xf32>
    %16 = tpu.reciprocal %15 {approx = true} : vector<128x128xf32> -> vector<128x128xf32>
    %17 = arith.mulf %10, %16 : vector<128x128xf32>
    %18 = vector.shape_cast %17 : vector<128x128xf32> to vector<1x128x128xf32>
    %c0_12 = arith.constant 0 : index
    %c0_13 = arith.constant 0 : index
    %c0_14 = arith.constant 0 : index
    %19 = vector.load %arg6[%c0_12, %c0_13, %c0_14] : memref<1x128x128xf32, #tpu.memory_space<vmem>>, vector<1x128x128xf32>
    tpu.vector_store %arg6[%c0_12, %c0_13, %c0_14], %18 {strides = array<i32>} : memref<1x128x128xf32, #tpu.memory_space<vmem>>, vector<1x128x128xf32>,
    %c128_i32 = arith.constant 128 : i32
    %20 = arith.muli %arg2, %c128_i32 : i32
    %21 = tpu.iota {dimensions = array<i32: 1>} : vector<128x128xi32>
    %22 = vector.broadcast %20 : i32 to vector<128x128xi32>
    %23 = arith.addi %22, %21 : vector<128x128xi32>
    %c16_i32 = arith.constant 16 : i32
    %24 = vector.broadcast %c16_i32 : i32 to vector<128x128xi32>
    %25 = arith.cmpi slt, %23, %24 : vector<128x128xi32>
    %cst_15 = arith.constant 0xFF800000 : f32
    %26 = vector.broadcast %cst_15 : f32 to vector<128x128xf32>
    %27 = arith.select %25, %17, %26 : vector<128x128xi1>, vector<128x128xf32>
    %cst_16 = arith.constant dense<0xFF800000> : vector<128xf32>
    %28 = vector.multi_reduction <maximumf>, %27, %cst_16 [1] : vector<128x128xf32> to vector<128xf32>
    %c0_17 = arith.constant 0 : index
    %c0_18 = arith.constant 0 : index
    %29 = vector.load %arg9[%c0_17, %c0_18] : memref<1x128xf32, #tpu.memory_space<vmem>>, vector<1x128xf32>
    %30 = vector.shape_cast %28 : vector<128xf32> to vector<1x128xf32>
    %31 = arith.maximumf %29, %30 : vector<1x128xf32>
    %c0_19 = arith.constant 0 : index
    %c0_20 = arith.constant 0 : index
    %32 = vector.load %arg9[%c0_19, %c0_20] : memref<1x128xf32, #tpu.memory_space<vmem>>, vector<1x128xf32>
    tpu.vector_store %arg9[%c0_19, %c0_20], %31 {strides = array<i32>} : memref<1x128xf32, #tpu.memory_space<vmem>>, vector<1x128xf32>,
    %c0_i32_21 = arith.constant 0 : i32
    %33 = arith.cmpi eq, %arg2, %c0_i32_21 : i32
    %34 = arith.extui %33 : i1 to i32
    %c0_i32_22 = arith.constant 0 : i32
    %35 = arith.cmpi ne, %34, %c0_i32_22 : i32
    scf.if %35 {
      %c0_23 = arith.constant 0 : index
      %c0_24 = arith.constant 0 : index
      %36 = vector.load %arg9[%c0_23, %c0_24] : memref<1x128xf32, #tpu.memory_space<vmem>>, vector<1x128xf32>
      %37 = vector.shape_cast %36 : vector<1x128xf32> to vector<1x1x128xf32>
      %c0_25 = arith.constant 0 : index
      %c0_26 = arith.constant 0 : index
      %c0_27 = arith.constant 0 : index
      %38 = vector.load %arg7[%c0_25, %c0_26, %c0_27] : memref<1x1x128xf32, #tpu.memory_space<vmem>>, vector<1x1x128xf32>
      tpu.vector_store %arg7[%c0_25, %c0_26, %c0_27], %37 {strides = array<i32>} : memref<1x1x128xf32, #tpu.memory_space<vmem>>, vector<1x1x128xf32>,
    } else {
    }
    return
  }
  func.func @transform_0(%arg0: i32, %arg1: i32, %arg2: i32) -> (i32, i32, i32) {
    %c0_i32 = arith.constant 0 : i32
    %c0_i32_0 = arith.constant 0 : i32
    return %arg0, %arg1, %c0_i32 : i32, i32, i32
  }
  func.func @transform_1(%arg0: i32, %arg1: i32, %arg2: i32) -> (i32, i32, i32) {
    %c0_i32 = arith.constant 0 : i32
    %c0_i32_0 = arith.constant 0 : i32
    return %arg0, %arg2, %c0_i32 : i32, i32, i32
  }
  func.func @transform_2(%arg0: i32, %arg1: i32, %arg2: i32) -> (i32, i32, i32) {
    %c0_i32 = arith.constant 0 : i32
    %c0_i32_0 = arith.constant 0 : i32
    return %arg0, %c0_i32, %arg2 : i32, i32, i32
  }
  func.func @transform_3(%arg0: i32, %arg1: i32, %arg2: i32) -> (i32, i32, i32) {
    %c0_i32 = arith.constant 0 : i32
    return %arg0, %arg1, %arg2 : i32, i32, i32
  }
  func.func @transform_4(%arg0: i32, %arg1: i32, %arg2: i32) -> (i32, i32, i32) {
    %c0_i32 = arith.constant 0 : i32
    %c0_i32_0 = arith.constant 0 : i32
    return %arg0, %c0_i32, %arg1 : i32, i32, i32
  }
}

</mosaic_0001>

<llo_original>
// kernel: tpu_custom_call.1
$region0: #{tpu_custom_call.1}
  #allocation0 [shape = 'u32[]', space=smem, size = 0x4, offset = 0x4, fixed_abs, tag = 'smem constant byte address 0x4 - core index']
  #allocation1 [shape = 'u32[72,128]{1,0:T(1,128)}', space=vmem, size = 0x9000, scoped, tag = 'internal scratch']
  #allocation2 [shape = 'f32[128,1]{1,0:T(8,128)}', space=vmem, size = 0x10000, scoped, tag = 'scratch operand']
  #allocation3 [shape = 'f32[1,128]{1,0:T(1,128)}', space=vmem, size = 0x200, scoped, tag = 'scratch operand']
  %s0 = inlined_call_operand.vmem [shape: f32[2,128,32], index: 0, kind: input, shape index: {}]
  %s1 = inlined_call_operand.vmem [shape: f32[2,128,32], index: 1, kind: input, shape index: {}]
  %s2 = inlined_call_operand.vmem [shape: f32[2,1,128], index: 2, kind: input, shape index: {}]
  %s3 = inlined_call_operand.hbm [shape: f32[2,128,128], index: 3, kind: output, shape index: {0}]
  %s4 = inlined_call_operand.hbm [shape: f32[2,1,128], index: 4, kind: output, shape index: {1}]
  %5 = xla_tuple %s3, %s4
  %s6 = sld [smem:[#allocation0]]
  $region61: #{tpu_custom_call.1} parent=0
    _
  %s8 = ssub.s32 1, %s6
  %s9 = scalar_select 0, %s8, %s6
  $region1: #{tpu_custom_call.1} parent=0
    #allocation4 [shape = 'u8[131072]{0}', space=vmem, size = 0x20000, scoped, tag = 'output window, operand 0']
    #allocation5 [shape = 's32[2]{0}', space=sflag, size = 0x8, scoped, tag = 'scoped memory for tpu_custom_call.1']
    #allocation6 [shape = 'u8[1024]{0}', space=vmem, size = 0x400, scoped, tag = 'output window, operand 1']
    #allocation7 [shape = 's32[2]{0}', space=sflag, size = 0x8, scoped, tag = 'scoped memory for tpu_custom_call.1']
    %10 = vsyncpa [#allocation5], 0
    %s11 = scalar_lea.sflag [#allocation5], 1
    %12 = vsyncpa %s11, 0
    %13 = vsyncpa [#allocation7], 0
    %s14 = scalar_lea.sflag [#allocation7], 1
    %15 = vsyncpa %s14, 0
    loop: start=0, step=1, limit=4
    $region2: #{tpu_custom_call.1} parent=1 // loop_pre_header
      _
    $region3: #{tpu_custom_call.1} parent=1 // loop_header
      %s17 = sphi 0, %s21
      %p18 = scmp.ge.s32.totalorder %s17, 4
      %s24 = sphi 0, %s43
      %s25 = sphi 0, %s39
      %s26 = sphi 0, %s35
      %s27 = sphi 0, %s24
      %s28 = sphi 0, %s25
      %s29 = sphi 0, %s26
      %s30 = sphi 0, %s27
      %s31 = sphi 0, %s28
      %s32 = sphi 0, %s29
      %s48 = sphi 0, %s50
      %s51 = sphi 0, %s48
      %s52 = sphi 0, %s51
      %s68 = sphi 0, %s52
      %s76 = sphi 0, %s78
      %s79 = sphi 0, %s76
      %s80 = sphi 0, %s79
      %s96 = sphi 0, %s80
      %s104 = sphi 0, %s106
      %s107 = sphi 0, %s104
      %s108 = sphi 0, %s107
      %s124 = sphi 0, %s108
      %s134 = sphi 0, %s136
      %s137 = sphi 0, %s134
      %s138 = sphi 0, %s137
      %s154 = sphi 0, %s138
      %s162 = sphi 0, %s164
      %s165 = sphi 0, %s162
      %s166 = sphi 0, %s165
      %s182 = sphi 0, %s166
    $region4: #{tpu_custom_call.1} parent=1 // loop_header_branch
      %20 = sbr.rel (%p18) target = $region8
    $region5: #{tpu_custom_call.1} parent=1 // loop_body
      %s22 = ssub.s32 %s17, 1
      %s23 = ssub.s32 %s17, 2
      %s33 = sadd.s32 1, %s26
      %p34 = scmp.ge.s32.totalorder %s33, 1
      %s35 = scalar_select %p34, 0, %s33
      %s36 = sadd.s32 1, %s25
      %s37 = scalar_select %p34, %s36, %s25
      %p38 = scmp.ge.s32.totalorder %s37, 1
      %s39 = scalar_select %p38, 0, %s37
      %s40 = sadd.s32 1, %s24
      %s41 = scalar_select %p38, %s40, %s24
      %p42 = scmp.ge.s32.totalorder %s41, 2
      %s43 = scalar_select %p42, 0, %s41
      %s44 = ssub.s32 %s24, %s43
      %s45 = ssub.s32 %s25, %s39
      %s46 = sor.u32 %s44, %s45
      %p47 = scmp.eq.s32.totalorder %s46, 0
      %s49 = sadd.s32 %s48, 1
      %s50 = scalar_select %p47, %s48, %s49
      %p53 = pneg %p47
      %p54 = scmp.eq.s32.totalorder %s17, 1
      %p55 = por %p53, %p54
      %p56 = scmp.ne.s32.totalorder %s48, %s51
      %p57 = scmp.eq.s32.totalorder %s17, 0
      %p58 = por %p56, %p57
      %p59 = scmp.ne.s32.totalorder %s48, %s51
      %p60 = scmp.eq.s32.totalorder %s22, 1
      %p61 = por %p59, %p60
      %p62 = scmp.ne.s32.totalorder %s51, %s52
      %p63 = scmp.eq.s32.totalorder %s22, 0
      %p64 = por %p62, %p63
      %p65 = scmp.ne.s32.totalorder %s51, %s52
      %p66 = scmp.eq.s32.totalorder %s23, 1
      %p67 = por %p65, %p66
      %p69 = scmp.ne.s32.totalorder %s52, %s68
      %p70 = scmp.eq.s32.totalorder %s23, 0
      %p71 = por %p69, %p70
      %s72 = ssub.s32 %s24, %s43
      %s73 = ssub.s32 %s26, %s35
      %s74 = sor.u32 %s72, %s73
      %p75 = scmp.eq.s32.totalorder %s74, 0
      %s77 = sadd.s32 %s76, 1
      %s78 = scalar_select %p75, %s76, %s77
      %p81 = pneg %p75
      %p82 = scmp.eq.s32.totalorder %s17, 1
      %p83 = por %p81, %p82
      %p84 = scmp.ne.s32.totalorder %s76, %s79
      %p85 = scmp.eq.s32.totalorder %s17, 0
      %p86 = por %p84, %p85
      %p87 = scmp.ne.s32.totalorder %s76, %s79
      %p88 = scmp.eq.s32.totalorder %s22, 1
      %p89 = por %p87, %p88
      %p90 = scmp.ne.s32.totalorder %s79, %s80
      %p91 = scmp.eq.s32.totalorder %s22, 0
      %p92 = por %p90, %p91
      %p93 = scmp.ne.s32.totalorder %s79, %s80
      %p94 = scmp.eq.s32.totalorder %s23, 1
      %p95 = por %p93, %p94
      %p97 = scmp.ne.s32.totalorder %s80, %s96
      %p98 = scmp.eq.s32.totalorder %s23, 0
      %p99 = por %p97, %p98
      %s100 = ssub.s32 %s24, %s43
      %s101 = ssub.s32 %s26, %s35
      %s102 = sor.u32 %s100, %s101
      %p103 = scmp.eq.s32.totalorder %s102, 0
      %s105 = sadd.s32 %s104, 1
      %s106 = scalar_select %p103, %s104, %s105
      %p109 = pneg %p103
      %p110 = scmp.eq.s32.totalorder %s17, 1
      %p111 = por %p109, %p110
      %p112 = scmp.ne.s32.totalorder %s104, %s107
      %p113 = scmp.eq.s32.totalorder %s17, 0
      %p114 = por %p112, %p113
      %p115 = scmp.ne.s32.totalorder %s104, %s107
      %p116 = scmp.eq.s32.totalorder %s22, 1
      %p117 = por %p115, %p116
      %p118 = scmp.ne.s32.totalorder %s107, %s108
      %p119 = scmp.eq.s32.totalorder %s22, 0
      %p120 = por %p118, %p119
      %p121 = scmp.ne.s32.totalorder %s107, %s108
      %p122 = scmp.eq.s32.totalorder %s23, 1
      %p123 = por %p121, %p122
      %p125 = scmp.ne.s32.totalorder %s108, %s124
      %p126 = scmp.eq.s32.totalorder %s23, 0
      %p127 = por %p125, %p126
      %s128 = ssub.s32 %s24, %s43
      %s129 = ssub.s32 %s25, %s39
      %s130 = sor.u32 %s128, %s129
      %s131 = ssub.s32 %s26, %s35
      %s132 = sor.u32 %s130, %s131
      %p133 = scmp.eq.s32.totalorder %s132, 0
      %s135 = sadd.s32 %s134, 1
      %s136 = scalar_select %p133, %s134, %s135
      %p139 = pneg %p133
      %p140 = scmp.eq.s32.totalorder %s17, 1
      %p141 = por %p139, %p140
      %p142 = scmp.ne.s32.totalorder %s134, %s137
      %p143 = scmp.eq.s32.totalorder %s17, 0
      %p144 = por %p142, %p143
      %p145 = scmp.ne.s32.totalorder %s134, %s137
      %p146 = scmp.eq.s32.totalorder %s22, 1
      %p147 = por %p145, %p146
      %p148 = scmp.ne.s32.totalorder %s137, %s138
      %p149 = scmp.eq.s32.totalorder %s22, 0
      %p150 = por %p148, %p149
      %p151 = scmp.ne.s32.totalorder %s137, %s138
      %p152 = scmp.eq.s32.totalorder %s23, 1
      %p153 = por %p151, %p152
      %p155 = scmp.ne.s32.totalorder %s138, %s154
      %p156 = scmp.eq.s32.totalorder %s23, 0
      %p157 = por %p155, %p156
      %s158 = ssub.s32 %s24, %s43
      %s159 = ssub.s32 %s25, %s39
      %s160 = sor.u32 %s158, %s159
      %p161 = scmp.eq.s32.totalorder %s160, 0
      %s163 = sadd.s32 %s162, 1
      %s164 = scalar_select %p161, %s162, %s163
      %p167 = pneg %p161
      %p168 = scmp.eq.s32.totalorder %s17, 1
      %p169 = por %p167, %p168
      %p170 = scmp.ne.s32.totalorder %s162, %s165
      %p171 = scmp.eq.s32.totalorder %s17, 0
      %p172 = por %p170, %p171
      %p173 = scmp.ne.s32.totalorder %s162, %s165
      %p174 = scmp.eq.s32.totalorder %s22, 1
      %p175 = por %p173, %p174
      %p176 = scmp.ne.s32.totalorder %s165, %s166
      %p177 = scmp.eq.s32.totalorder %s22, 0
      %p178 = por %p176, %p177
      %p179 = scmp.ne.s32.totalorder %s165, %s166
      %p180 = scmp.eq.s32.totalorder %s23, 1
      %p181 = por %p179, %p180
      %p183 = scmp.ne.s32.totalorder %s166, %s182
      %p184 = scmp.eq.s32.totalorder %s23, 0
      %p185 = por %p183, %p184
      %p186 = scmp.le.s32.totalorder 1, %s17
      %p187 = scmp.lt.s32.totalorder %s17, 3
      %p188 = pnand %p186, %p187
      %p189 = pneg %p188
      // Predicated region
      $region9: #{tpu_custom_call.1} parent=5 // pred_check
        _
      $region10: #{tpu_custom_call.1} parent=5 // pred_check_branch
        %191 = sbr.rel (%p188) target = $region12
      $region11: #{tpu_custom_call.1} parent=5 // pred_region
        %s192 = ssub.s32 %s17, 1
      $region12: #{tpu_custom_call.1} parent=5 // pred_fallthru
        _
      %p193 = scmp.lt.s32.totalorder %s17, 2
      // Predicated region
      $region13: #{tpu_custom_call.1} parent=5 // pred_check
        %p194 = pneg %p193
      $region14: #{tpu_custom_call.1} parent=5 // pred_check_branch
        %196 = sbr.rel (%p194) target = $region16
      $region15: #{tpu_custom_call.1} parent=5 // pred_region
        // Predicated region
        $region17: #{tpu_custom_call.1} parent=15 // pred_check
          %p197 = pneg %p58
        $region18: #{tpu_custom_call.1} parent=15 // pred_check_branch
          %199 = sbr.rel (%p197) target = $region20
        $region19: #{tpu_custom_call.1} parent=15 // pred_region
          %s200 = smul.u32 16, %s25
          %p201 = scmp.lt.s32.totalorder %s24, 1
          %s202 = scalar_select %p201, %s24, 1
          %p203 = scmp.lt.s32.totalorder %s200, 15
          %s204 = scalar_select %p203, %s200, 15
          %s205 = smul.addr %s202, 16
          %s206 = sadd.s32 %s204, %s205
          %s207 = smul.addr %s206, 8
          %s208 = scalar_lea.vmem %s0, %s207
          %s209 = smul.u32 16, %s25
        $region20: #{tpu_custom_call.1} parent=15 // pred_fallthru
          _
        // Predicated region
        $region21: #{tpu_custom_call.1} parent=15 // pred_check
          %p210 = pneg %p86
        $region22: #{tpu_custom_call.1} parent=15 // pred_check_branch
          %212 = sbr.rel (%p210) target = $region24
        $region23: #{tpu_custom_call.1} parent=15 // pred_region
          %s213 = smul.u32 16, %s26
          %p214 = scmp.lt.s32.totalorder %s24, 1
          %s215 = scalar_select %p214, %s24, 1
          %p216 = scmp.lt.s32.totalorder %s213, 15
          %s217 = scalar_select %p216, %s213, 15
          %s218 = smul.addr %s215, 16
          %s219 = sadd.s32 %s217, %s218
          %s220 = smul.addr %s219, 8
          %s221 = scalar_lea.vmem %s1, %s220
          %s222 = smul.u32 16, %s26
        $region24: #{tpu_custom_call.1} parent=15 // pred_fallthru
          _
        // Predicated region
        $region25: #{tpu_custom_call.1} parent=15 // pred_check
          %p223 = pneg %p114
        $region26: #{tpu_custom_call.1} parent=15 // pred_check_branch
          %225 = sbr.rel (%p223) target = $region28
        $region27: #{tpu_custom_call.1} parent=15 // pred_region
          %p226 = scmp.lt.s32.totalorder %s24, 1
          %s227 = scalar_select %p226, %s24, 1
          %p228 = scmp.lt.s32.totalorder %s26, 0
          %s229 = scalar_select %p228, %s26, 0
          %s230 = sadd.s32 %s229, %s227
          %s231 = scalar_lea.vmem %s2, %s230
        $region28: #{tpu_custom_call.1} parent=15 // pred_fallthru
          _
      $region16: #{tpu_custom_call.1} parent=5 // pred_fallthru
        _
      %p232 = scmp.le.s32.totalorder 1, %s17
      %p233 = scmp.lt.s32.totalorder %s17, 3
      %p234 = pnand %p232, %p233
      %p235 = pneg %p234
      // Predicated region
      $region29: #{tpu_custom_call.1} parent=5 // pred_check
        _
      $region30: #{tpu_custom_call.1} parent=5 // pred_check_branch
        %237 = sbr.rel (%p234) target = $region32
      $region31: #{tpu_custom_call.1} parent=5 // pred_region
        %s238 = ssub.s32 %s17, 1
        %s239 = smul.u32 16, %s28
        %p240 = scmp.lt.s32.totalorder %s27, 1
        %s241 = scalar_select %p240, %s27, 1
        %p242 = scmp.lt.s32.totalorder %s239, 15
        %s243 = scalar_select %p242, %s239, 15
        %s244 = smul.addr %s241, 16
        %s245 = sadd.s32 %s243, %s244
        %s246 = smul.addr %s245, 8
        %s247 = scalar_lea.vmem %s0, %s246
        %p248 = pneg %p64
        %p249 = pneg %p61
        %s250 = smul.u32 16, %s29
        %p251 = scmp.lt.s32.totalorder %s27, 1
        %s252 = scalar_select %p251, %s27, 1
        %p253 = scmp.lt.s32.totalorder %s250, 15
        %s254 = scalar_select %p253, %s250, 15
        %s255 = smul.addr %s252, 16
        %s256 = sadd.s32 %s254, %s255
        %s257 = smul.addr %s256, 8
        %s258 = scalar_lea.vmem %s1, %s257
        %p259 = pneg %p92
        %p260 = pneg %p89
        %p261 = scmp.lt.s32.totalorder %s27, 1
        %s262 = scalar_select %p261, %s27, 1
        %p263 = scmp.lt.s32.totalorder %s29, 0
        %s264 = scalar_select %p263, %s29, 0
        %s265 = sadd.s32 %s264, %s262
        %s266 = scalar_lea.vmem %s2, %s265
        %p267 = pneg %p120
        %p268 = pneg %p117
        %p269 = pneg %p150
        %p270 = pneg %p147
        %s271 = sand.u32 %s137, 1
        %s272 = scalar_lea.sflag [#allocation5], %s271
        %s273 = sand.u32 %s137, 1
        %s274 = smul.addr %s273, 128
        %s275 = scalar_lea.vmem [#allocation4], %s274
        %p276 = pneg %p178
        %p277 = pneg %p175
        %s278 = sand.u32 %s165, 1
        %s279 = scalar_lea.sflag [#allocation7], %s278
        %s280 = sand.u32 %s165, 1
        %s281 = scalar_lea.vmem [#allocation6], %s280
        %s282 = smul.u32 16, %s28
        %p283 = scmp.lt.s32.totalorder %s27, 1
        %s284 = scalar_select %p283, %s27, 1
        %p285 = scmp.lt.s32.totalorder %s282, 15
        %s286 = scalar_select %p285, %s282, 15
        %s287 = smul.addr %s284, 16
        %s288 = sadd.s32 %s286, %s287
        %s289 = smul.addr %s288, 8
        %s290 = scalar_lea.vmem %s0, %s289
        %s291 = smul.u32 16, %s28
        %s292 = smul.u32 16, %s29
        %p293 = scmp.lt.s32.totalorder %s27, 1
        %s294 = scalar_select %p293, %s27, 1
        %p295 = scmp.lt.s32.totalorder %s292, 15
        %s296 = scalar_select %p295, %s292, 15
        %s297 = smul.addr %s294, 16
        %s298 = sadd.s32 %s296, %s297
        %s299 = smul.addr %s298, 8
        %s300 = scalar_lea.vmem %s1, %s299
        %s301 = smul.u32 16, %s29
        %p302 = scmp.lt.s32.totalorder %s27, 1
        %s303 = scalar_select %p302, %s27, 1
        %p304 = scmp.lt.s32.totalorder %s29, 0
        %s305 = scalar_select %p304, %s29, 0
        %s306 = sadd.s32 %s305, %s303
        %s307 = scalar_lea.vmem %s2, %s306
        %s308 = smul.u32 16, %s28
        %v309 = vld [vmem:[%s290] sm:$0xff]
        %v310 = vld [vmem:[%s290 + $0x8] sm:$0xff]
        %v311 = vld [vmem:[%s290 + $0x10] sm:$0xff]
        %v312 = vld [vmem:[%s290 + $0x18] sm:$0xff]
        %v313 = vld [vmem:[%s290 + $0x20] sm:$0xff]
        %v314 = vld [vmem:[%s290 + $0x28] sm:$0xff]
        %v315 = vld [vmem:[%s290 + $0x30] sm:$0xff]
        %v316 = vld [vmem:[%s290 + $0x38] sm:$0xff]
        %v317 = vld [vmem:[%s290 + $0x40] sm:$0xff]
        %v318 = vld [vmem:[%s290 + $0x48] sm:$0xff]
        %v319 = vld [vmem:[%s290 + $0x50] sm:$0xff]
        %v320 = vld [vmem:[%s290 + $0x58] sm:$0xff]
        %v321 = vld [vmem:[%s290 + $0x60] sm:$0xff]
        %v322 = vld [vmem:[%s290 + $0x68] sm:$0xff]
        %v323 = vld [vmem:[%s290 + $0x70] sm:$0xff]
        %v324 = vld [vmem:[%s290 + $0x78] sm:$0xff]
        %v325 = vld [vmem:[%s300] sm:$0xff]
        %v326 = vld [vmem:[%s300 + $0x8] sm:$0xff]
        %v327 = vld [vmem:[%s300 + $0x10] sm:$0xff]
        %v328 = vld [vmem:[%s300 + $0x18] sm:$0xff]
        %v329 = vld [vmem:[%s300 + $0x20] sm:$0xff]
        %v330 = vld [vmem:[%s300 + $0x28] sm:$0xff]
        %v331 = vld [vmem:[%s300 + $0x30] sm:$0xff]
        %v332 = vld [vmem:[%s300 + $0x38] sm:$0xff]
        %v333 = vld [vmem:[%s300 + $0x40] sm:$0xff]
        %v334 = vld [vmem:[%s300 + $0x48] sm:$0xff]
        %v335 = vld [vmem:[%s300 + $0x50] sm:$0xff]
        %v336 = vld [vmem:[%s300 + $0x58] sm:$0xff]
        %v337 = vld [vmem:[%s300 + $0x60] sm:$0xff]
        %v338 = vld [vmem:[%s300 + $0x68] sm:$0xff]
        %v339 = vld [vmem:[%s300 + $0x70] sm:$0xff]
        %v340 = vld [vmem:[%s300 + $0x78] sm:$0xff]
        %v341 = vld [vmem:[%s307] sm:$0x1]
        %p342 = scmp.eq.s32.totalorder %s29, 0
        // Predicated region
        $region33: #{tpu_custom_call.1} parent=31 // pred_check
          %p343 = pneg %p342
        $region34: #{tpu_custom_call.1} parent=31 // pred_check_branch
          %345 = sbr.rel (%p343) target = $region36
        $region35: #{tpu_custom_call.1} parent=31 // pred_region
          %v346 = vmul.f32 %v309, %v309
          %v347 = vmul.f32 %v310, %v310
          %v348 = vmul.f32 %v311, %v311
          %v349 = vmul.f32 %v312, %v312
          %v350 = vmul.f32 %v313, %v313
          %v351 = vmul.f32 %v314, %v314
          %v352 = vmul.f32 %v315, %v315
          %v353 = vmul.f32 %v316, %v316
          %v354 = vmul.f32 %v317, %v317
          %v355 = vmul.f32 %v318, %v318
          %v356 = vmul.f32 %v319, %v319
          %v357 = vmul.f32 %v320, %v320
          %v358 = vmul.f32 %v321, %v321
          %v359 = vmul.f32 %v322, %v322
          %v360 = vmul.f32 %v323, %v323
          %v361 = vmul.f32 %v324, %v324
          %vm362 = vcmask 261120
          %v363 = vsel %vm362, %v346, 0.0
          %364 = vadd.xlane.f32.xlu0 %v363
          %v365 = vpop.xlane.xlu0 %364
          %v366 = vsel %vm362, %v347, 0.0
          %367 = vadd.xlane.f32.xlu0 %v366
          %v368 = vpop.xlane.xlu0 %367
          %v369 = vsel %vm362, %v348, 0.0
          %370 = vadd.xlane.f32.xlu0 %v369
          %v371 = vpop.xlane.xlu0 %370
          %v372 = vsel %vm362, %v349, 0.0
          %373 = vadd.xlane.f32.xlu0 %v372
          %v374 = vpop.xlane.xlu0 %373
          %v375 = vsel %vm362, %v350, 0.0
          %376 = vadd.xlane.f32.xlu0 %v375
          %v377 = vpop.xlane.xlu0 %376
          %v378 = vsel %vm362, %v351, 0.0
          %379 = vadd.xlane.f32.xlu0 %v378
          %v380 = vpop.xlane.xlu0 %379
          %v381 = vsel %vm362, %v352, 0.0
          %382 = vadd.xlane.f32.xlu0 %v381
          %v383 = vpop.xlane.xlu0 %382
          %v384 = vsel %vm362, %v353, 0.0
          %385 = vadd.xlane.f32.xlu0 %v384
          %v386 = vpop.xlane.xlu0 %385
          %v387 = vsel %vm362, %v354, 0.0
          %388 = vadd.xlane.f32.xlu0 %v387
          %v389 = vpop.xlane.xlu0 %388
          %v390 = vsel %vm362, %v355, 0.0
          %391 = vadd.xlane.f32.xlu0 %v390
          %v392 = vpop.xlane.xlu0 %391
          %v393 = vsel %vm362, %v356, 0.0
          %394 = vadd.xlane.f32.xlu0 %v393
          %v395 = vpop.xlane.xlu0 %394
          %v396 = vsel %vm362, %v357, 0.0
          %397 = vadd.xlane.f32.xlu0 %v396
          %v398 = vpop.xlane.xlu0 %397
          %v399 = vsel %vm362, %v358, 0.0
          %400 = vadd.xlane.f32.xlu0 %v399
          %v401 = vpop.xlane.xlu0 %400
          %v402 = vsel %vm362, %v359, 0.0
          %403 = vadd.xlane.f32.xlu0 %v402
          %v404 = vpop.xlane.xlu0 %403
          %v405 = vsel %vm362, %v360, 0.0
          %406 = vadd.xlane.f32.xlu0 %v405
          %v407 = vpop.xlane.xlu0 %406
          %v408 = vsel %vm362, %v361, 0.0
          %409 = vadd.xlane.f32.xlu0 %v408
          %v410 = vpop.xlane.xlu0 %409
          %v411 = vrsqrt.pop %v365
          %v412 = vmul.f32 %v411, %v365
          %v413 = vmul.f32 %v412, %v411
          %v414 = vmul.f32 0.5, %v413
          %v415 = vsub.f32 1.5, %v414
          %v416 = vmul.f32 %v411, %v415
          %v417 = vmul.f32 %v365, %v416
          %vm418 = vcmp.eq.f32.partialorder %v365, inf
          %v419 = vsel %vm418, %v365, %v417
          %vm420 = vcmp.eq.f32.partialorder %v365, 0.0
          %v421 = vand.u32 %v365, 2147483648
          %v422 = vsel %vm420, %v421, %v419
          %v423 = vrsqrt.pop %v368
          %v424 = vmul.f32 %v423, %v368
          %v425 = vmul.f32 %v424, %v423
          %v426 = vmul.f32 0.5, %v425
          %v427 = vsub.f32 1.5, %v426
          %v428 = vmul.f32 %v423, %v427
          %v429 = vmul.f32 %v368, %v428
          %vm430 = vcmp.eq.f32.partialorder %v368, inf
          %v431 = vsel %vm430, %v368, %v429
          %vm432 = vcmp.eq.f32.partialorder %v368, 0.0
          %v433 = vand.u32 %v368, 2147483648
          %v434 = vsel %vm432, %v433, %v431
          %v435 = vrsqrt.pop %v371
          %v436 = vmul.f32 %v435, %v371
          %v437 = vmul.f32 %v436, %v435
          %v438 = vmul.f32 0.5, %v437
          %v439 = vsub.f32 1.5, %v438
          %v440 = vmul.f32 %v435, %v439
          %v441 = vmul.f32 %v371, %v440
          %vm442 = vcmp.eq.f32.partialorder %v371, inf
          %v443 = vsel %vm442, %v371, %v441
          %vm444 = vcmp.eq.f32.partialorder %v371, 0.0
          %v445 = vand.u32 %v371, 2147483648
          %v446 = vsel %vm444, %v445, %v443
          %v447 = vrsqrt.pop %v374
          %v448 = vmul.f32 %v447, %v374
          %v449 = vmul.f32 %v448, %v447
          %v450 = vmul.f32 0.5, %v449
          %v451 = vsub.f32 1.5, %v450
          %v452 = vmul.f32 %v447, %v451
          %v453 = vmul.f32 %v374, %v452
          %vm454 = vcmp.eq.f32.partialorder %v374, inf
          %v455 = vsel %vm454, %v374, %v453
          %vm456 = vcmp.eq.f32.partialorder %v374, 0.0
          %v457 = vand.u32 %v374, 2147483648
          %v458 = vsel %vm456, %v457, %v455
          %v459 = vrsqrt.pop %v377
          %v460 = vmul.f32 %v459, %v377
          %v461 = vmul.f32 %v460, %v459
          %v462 = vmul.f32 0.5, %v461
          %v463 = vsub.f32 1.5, %v462
          %v464 = vmul.f32 %v459, %v463
          %v465 = vmul.f32 %v377, %v464
          %vm466 = vcmp.eq.f32.partialorder %v377, inf
          %v467 = vsel %vm466, %v377, %v465
          %vm468 = vcmp.eq.f32.partialorder %v377, 0.0
          %v469 = vand.u32 %v377, 2147483648
          %v470 = vsel %vm468, %v469, %v467
          %v471 = vrsqrt.pop %v380
          %v472 = vmul.f32 %v471, %v380
          %v473 = vmul.f32 %v472, %v471
          %v474 = vmul.f32 0.5, %v473
          %v475 = vsub.f32 1.5, %v474
          %v476 = vmul.f32 %v471, %v475
          %v477 = vmul.f32 %v380, %v476
          %vm478 = vcmp.eq.f32.partialorder %v380, inf
          %v479 = vsel %vm478, %v380, %v477
          %vm480 = vcmp.eq.f32.partialorder %v380, 0.0
          %v481 = vand.u32 %v380, 2147483648
          %v482 = vsel %vm480, %v481, %v479
          %v483 = vrsqrt.pop %v383
          %v484 = vmul.f32 %v483, %v383
          %v485 = vmul.f32 %v484, %v483
          %v486 = vmul.f32 0.5, %v485
          %v487 = vsub.f32 1.5, %v486
          %v488 = vmul.f32 %v483, %v487
          %v489 = vmul.f32 %v383, %v488
          %vm490 = vcmp.eq.f32.partialorder %v383, inf
          %v491 = vsel %vm490, %v383, %v489
          %vm492 = vcmp.eq.f32.partialorder %v383, 0.0
          %v493 = vand.u32 %v383, 2147483648
          %v494 = vsel %vm492, %v493, %v491
          %v495 = vrsqrt.pop %v386
          %v496 = vmul.f32 %v495, %v386
          %v497 = vmul.f32 %v496, %v495
          %v498 = vmul.f32 0.5, %v497
          %v499 = vsub.f32 1.5, %v498
          %v500 = vmul.f32 %v495, %v499
          %v501 = vmul.f32 %v386, %v500
          %vm502 = vcmp.eq.f32.partialorder %v386, inf
          %v503 = vsel %vm502, %v386, %v501
          %vm504 = vcmp.eq.f32.partialorder %v386, 0.0
          %v505 = vand.u32 %v386, 2147483648
          %v506 = vsel %vm504, %v505, %v503
          %v507 = vrsqrt.pop %v389
          %v508 = vmul.f32 %v507, %v389
          %v509 = vmul.f32 %v508, %v507
          %v510 = vmul.f32 0.5, %v509
          %v511 = vsub.f32 1.5, %v510
          %v512 = vmul.f32 %v507, %v511
          %v513 = vmul.f32 %v389, %v512
          %vm514 = vcmp.eq.f32.partialorder %v389, inf
          %v515 = vsel %vm514, %v389, %v513
          %vm516 = vcmp.eq.f32.partialorder %v389, 0.0
          %v517 = vand.u32 %v389, 2147483648
          %v518 = vsel %vm516, %v517, %v515
          %v519 = vrsqrt.pop %v392
          %v520 = vmul.f32 %v519, %v392
          %v521 = vmul.f32 %v520, %v519
          %v522 = vmul.f32 0.5, %v521
          %v523 = vsub.f32 1.5, %v522
          %v524 = vmul.f32 %v519, %v523
          %v525 = vmul.f32 %v392, %v524
          %vm526 = vcmp.eq.f32.partialorder %v392, inf
          %v527 = vsel %vm526, %v392, %v525
          %vm528 = vcmp.eq.f32.partialorder %v392, 0.0
          %v529 = vand.u32 %v392, 2147483648
          %v530 = vsel %vm528, %v529, %v527
          %v531 = vrsqrt.pop %v395
          %v532 = vmul.f32 %v531, %v395
          %v533 = vmul.f32 %v532, %v531
          %v534 = vmul.f32 0.5, %v533
          %v535 = vsub.f32 1.5, %v534
          %v536 = vmul.f32 %v531, %v535
          %v537 = vmul.f32 %v395, %v536
          %vm538 = vcmp.eq.f32.partialorder %v395, inf
          %v539 = vsel %vm538, %v395, %v537
          %vm540 = vcmp.eq.f32.partialorder %v395, 0.0
          %v541 = vand.u32 %v395, 2147483648
          %v542 = vsel %vm540, %v541, %v539
          %v543 = vrsqrt.pop %v398
          %v544 = vmul.f32 %v543, %v398
          %v545 = vmul.f32 %v544, %v543
          %v546 = vmul.f32 0.5, %v545
          %v547 = vsub.f32 1.5, %v546
          %v548 = vmul.f32 %v543, %v547
          %v549 = vmul.f32 %v398, %v548
          %vm550 = vcmp.eq.f32.partialorder %v398, inf
          %v551 = vsel %vm550, %v398, %v549
          %vm552 = vcmp.eq.f32.partialorder %v398, 0.0
          %v553 = vand.u32 %v398, 2147483648
          %v554 = vsel %vm552, %v553, %v551
          %v555 = vrsqrt.pop %v401
          %v556 = vmul.f32 %v555, %v401
          %v557 = vmul.f32 %v556, %v555
          %v558 = vmul.f32 0.5, %v557
          %v559 = vsub.f32 1.5, %v558
          %v560 = vmul.f32 %v555, %v559
          %v561 = vmul.f32 %v401, %v560
          %vm562 = vcmp.eq.f32.partialorder %v401, inf
          %v563 = vsel %vm562, %v401, %v561
          %vm564 = vcmp.eq.f32.partialorder %v401, 0.0
          %v565 = vand.u32 %v401, 2147483648
          %v566 = vsel %vm564, %v565, %v563
          %v567 = vrsqrt.pop %v404
          %v568 = vmul.f32 %v567, %v404
          %v569 = vmul.f32 %v568, %v567
          %v570 = vmul.f32 0.5, %v569
          %v571 = vsub.f32 1.5, %v570
          %v572 = vmul.f32 %v567, %v571
          %v573 = vmul.f32 %v404, %v572
          %vm574 = vcmp.eq.f32.partialorder %v404, inf
          %v575 = vsel %vm574, %v404, %v573
          %vm576 = vcmp.eq.f32.partialorder %v404, 0.0
          %v577 = vand.u32 %v404, 2147483648
          %v578 = vsel %vm576, %v577, %v575
          %v579 = vrsqrt.pop %v407
          %v580 = vmul.f32 %v579, %v407
          %v581 = vmul.f32 %v580, %v579
          %v582 = vmul.f32 0.5, %v581
          %v583 = vsub.f32 1.5, %v582
          %v584 = vmul.f32 %v579, %v583
          %v585 = vmul.f32 %v407, %v584
          %vm586 = vcmp.eq.f32.partialorder %v407, inf
          %v587 = vsel %vm586, %v407, %v585
          %vm588 = vcmp.eq.f32.partialorder %v407, 0.0
          %v589 = vand.u32 %v407, 2147483648
          %v590 = vsel %vm588, %v589, %v587
          %v591 = vrsqrt.pop %v410
          %v592 = vmul.f32 %v591, %v410
          %v593 = vmul.f32 %v592, %v591
          %v594 = vmul.f32 0.5, %v593
          %v595 = vsub.f32 1.5, %v594
          %v596 = vmul.f32 %v591, %v595
          %v597 = vmul.f32 %v410, %v596
          %vm598 = vcmp.eq.f32.partialorder %v410, inf
          %v599 = vsel %vm598, %v410, %v597
          %vm600 = vcmp.eq.f32.partialorder %v410, 0.0
          %v601 = vand.u32 %v410, 2147483648
          %v602 = vsel %vm600, %v601, %v599
          %vm603 = vcmask 7168
          %604 = vst.msk [vmem:[#allocation2] sm:$0xff] %vm603, %v422
          %605 = vst.msk [vmem:[#allocation2 + $0x8] sm:$0xff] %vm603, %v434
          %606 = vst.msk [vmem:[#allocation2 + $0x10] sm:$0xff] %vm603, %v446
          %607 = vst.msk [vmem:[#allocation2 + $0x18] sm:$0xff] %vm603, %v458
          %608 = vst.msk [vmem:[#allocation2 + $0x20] sm:$0xff] %vm603, %v470
          %609 = vst.msk [vmem:[#allocation2 + $0x28] sm:$0xff] %vm603, %v482
          %610 = vst.msk [vmem:[#allocation2 + $0x30] sm:$0xff] %vm603, %v494
          %611 = vst.msk [vmem:[#allocation2 + $0x38] sm:$0xff] %vm603, %v506
          %612 = vst.msk [vmem:[#allocation2 + $0x40] sm:$0xff] %vm603, %v518
          %613 = vst.msk [vmem:[#allocation2 + $0x48] sm:$0xff] %vm603, %v530
          %614 = vst.msk [vmem:[#allocation2 + $0x50] sm:$0xff] %vm603, %v542
          %615 = vst.msk [vmem:[#allocation2 + $0x58] sm:$0xff] %vm603, %v554
          %616 = vst.msk [vmem:[#allocation2 + $0x60] sm:$0xff] %vm603, %v566
          %617 = vst.msk [vmem:[#allocation2 + $0x68] sm:$0xff] %vm603, %v578
          %618 = vst.msk [vmem:[#allocation2 + $0x70] sm:$0xff] %vm603, %v590
          %619 = vst.msk [vmem:[#allocation2 + $0x78] sm:$0xff] %vm603, %v602
          %620 = vst [vmem:[#allocation3] sm:$0x1] -inf
        $region36: #{tpu_custom_call.1} parent=31 // pred_fallthru
          _
        %v621 = vld [vmem:[#allocation2] sm:$0xff]
        %v622 = vld [vmem:[#allocation2 + $0x8] sm:$0xff]
        %v623 = vld [vmem:[#allocation2 + $0x10] sm:$0xff]
        %v624 = vld [vmem:[#allocation2 + $0x18] sm:$0xff]
        %v625 = vld [vmem:[#allocation2 + $0x20] sm:$0xff]
        %v626 = vld [vmem:[#allocation2 + $0x28] sm:$0xff]
        %v627 = vld [vmem:[#allocation2 + $0x30] sm:$0xff]
        %v628 = vld [vmem:[#allocation2 + $0x38] sm:$0xff]
        %v629 = vld [vmem:[#allocation2 + $0x40] sm:$0xff]
        %v630 = vld [vmem:[#allocation2 + $0x48] sm:$0xff]
        %v631 = vld [vmem:[#allocation2 + $0x50] sm:$0xff]
        %v632 = vld [vmem:[#allocation2 + $0x58] sm:$0xff]
        %v633 = vld [vmem:[#allocation2 + $0x60] sm:$0xff]
        %v634 = vld [vmem:[#allocation2 + $0x68] sm:$0xff]
        %v635 = vld [vmem:[#allocation2 + $0x70] sm:$0xff]
        %v636 = vld [vmem:[#allocation2 + $0x78] sm:$0xff]
        %vm637 = vcmask 261120
        %v639 = vsel %vm637, %v309, 0
        %v642 = vsel %vm637, %v310, 0
        %v645 = vsel %vm637, %v311, 0
        %v648 = vsel %vm637, %v312, 0
        %v651 = vsel %vm637, %v313, 0
        %v654 = vsel %vm637, %v314, 0
        %v657 = vsel %vm637, %v315, 0
        %v660 = vsel %vm637, %v316, 0
        %v663 = vsel %vm637, %v317, 0
        %v666 = vsel %vm637, %v318, 0
        %v669 = vsel %vm637, %v319, 0
        %v672 = vsel %vm637, %v320, 0
        %v675 = vsel %vm637, %v321, 0
        %v678 = vsel %vm637, %v322, 0
        %v681 = vsel %vm637, %v323, 0
        %v684 = vsel %vm637, %v324, 0
        %v687 = vsel %vm637, %v325, 0
        %v690 = vsel %vm637, %v326, 0
        %v693 = vsel %vm637, %v327, 0
        %v696 = vsel %vm637, %v328, 0
        %v699 = vsel %vm637, %v329, 0
        %v702 = vsel %vm637, %v330, 0
        %v705 = vsel %vm637, %v331, 0
        %v708 = vsel %vm637, %v332, 0
        %v711 = vsel %vm637, %v333, 0
        %v714 = vsel %vm637, %v334, 0
        %v717 = vsel %vm637, %v335, 0
        %v720 = vsel %vm637, %v336, 0
        %v723 = vsel %vm637, %v337, 0
        %v726 = vsel %vm637, %v338, 0
        %v729 = vsel %vm637, %v339, 0
        %v732 = vsel %vm637, %v340, 0
        %734 = vmatpush.xpose.msra.mxu0 %v732
        %735 = vmatpush.xpose.msra.mxu0 %v729
        %736 = vmatpush.xpose.msra.mxu0 %v726
        %737 = vmatpush.xpose.msra.mxu0 %v723
        %738 = vmatpush.xpose.msra.mxu0 %v720
        %739 = vmatpush.xpose.msra.mxu0 %v717
        %740 = vmatpush.xpose.msra.mxu0 %v714
        %741 = vmatpush.xpose.msra.mxu0 %v711
        %742 = vmatpush.xpose.msra.mxu0 %v708
        %743 = vmatpush.xpose.msra.mxu0 %v705
        %744 = vmatpush.xpose.msra.mxu0 %v702
        %745 = vmatpush.xpose.msra.mxu0 %v699
        %746 = vmatpush.xpose.msra.mxu0 %v696
        %747 = vmatpush.xpose.msra.mxu0 %v693
        %748 = vmatpush.xpose.msra.mxu0 %v690
        %749 = vmatpush.xpose.msra.mxu0 %v687
        %750 = vmatmul.f32.gmra.mxu0 %v639
        %v751 = vpop.f32.mrf.mxu0
        %v752 = vadd.f32 0.0, %v751
        %753 = vmatmul.f32.gmra.mxu0 %v642
        %v754 = vpop.f32.mrf.mxu0
        %v755 = vadd.f32 0.0, %v754
        %756 = vmatmul.f32.gmra.mxu0 %v645
        %v757 = vpop.f32.mrf.mxu0
        %v758 = vadd.f32 0.0, %v757
        %759 = vmatmul.f32.gmra.mxu0 %v648
        %v760 = vpop.f32.mrf.mxu0
        %v761 = vadd.f32 0.0, %v760
        %762 = vmatmul.f32.gmra.mxu0 %v651
        %v763 = vpop.f32.mrf.mxu0
        %v764 = vadd.f32 0.0, %v763
        %765 = vmatmul.f32.gmra.mxu0 %v654
        %v766 = vpop.f32.mrf.mxu0
        %v767 = vadd.f32 0.0, %v766
        %768 = vmatmul.f32.gmra.mxu0 %v657
        %v769 = vpop.f32.mrf.mxu0
        %v770 = vadd.f32 0.0, %v769
        %771 = vmatmul.f32.gmra.mxu0 %v660
        %v772 = vpop.f32.mrf.mxu0
        %v773 = vadd.f32 0.0, %v772
        %774 = vmatmul.f32.gmra.mxu0 %v663
        %v775 = vpop.f32.mrf.mxu0
        %v776 = vadd.f32 0.0, %v775
        %777 = vmatmul.f32.gmra.mxu0 %v666
        %v778 = vpop.f32.mrf.mxu0
        %v779 = vadd.f32 0.0, %v778
        %780 = vmatmul.f32.gmra.mxu0 %v669
        %v781 = vpop.f32.mrf.mxu0
        %v782 = vadd.f32 0.0, %v781
        %783 = vmatmul.f32.gmra.mxu0 %v672
        %v784 = vpop.f32.mrf.mxu0
        %v785 = vadd.f32 0.0, %v784
        %786 = vmatmul.f32.gmra.mxu0 %v675
        %v787 = vpop.f32.mrf.mxu0
        %v788 = vadd.f32 0.0, %v787
        %789 = vmatmul.f32.gmra.mxu0 %v678
        %v790 = vpop.f32.mrf.mxu0
        %v791 = vadd.f32 0.0, %v790
        %792 = vmatmul.f32.gmra.mxu0 %v681
        %v793 = vpop.f32.mrf.mxu0
        %v794 = vadd.f32 0.0, %v793
        %795 = vmatmul.f32.gmra.mxu0 %v684
        %v796 = vpop.f32.mrf.mxu0
        %v797 = vadd.f32 0.0, %v796
        %798 = vdwg.mxu0
        %800 = vset.pattern.permute.xlu0 0
        %801 = vperm.xlu0 %800, %v621
        %v802 = vpop.permute.xlu0 %801
        %805 = vset.pattern.permute.xlu0 0
        %806 = vperm.xlu0 %805, %v622
        %v807 = vpop.permute.xlu0 %806
        %810 = vset.pattern.permute.xlu0 0
        %811 = vperm.xlu0 %810, %v623
        %v812 = vpop.permute.xlu0 %811
        %815 = vset.pattern.permute.xlu0 0
        %816 = vperm.xlu0 %815, %v624
        %v817 = vpop.permute.xlu0 %816
        %820 = vset.pattern.permute.xlu0 0
        %821 = vperm.xlu0 %820, %v625
        %v822 = vpop.permute.xlu0 %821
        %825 = vset.pattern.permute.xlu0 0
        %826 = vperm.xlu0 %825, %v626
        %v827 = vpop.permute.xlu0 %826
        %830 = vset.pattern.permute.xlu0 0
        %831 = vperm.xlu0 %830, %v627
        %v832 = vpop.permute.xlu0 %831
        %835 = vset.pattern.permute.xlu0 0
        %836 = vperm.xlu0 %835, %v628
        %v837 = vpop.permute.xlu0 %836
        %840 = vset.pattern.permute.xlu0 0
        %841 = vperm.xlu0 %840, %v629
        %v842 = vpop.permute.xlu0 %841
        %845 = vset.pattern.permute.xlu0 0
        %846 = vperm.xlu0 %845, %v630
        %v847 = vpop.permute.xlu0 %846
        %850 = vset.pattern.permute.xlu0 0
        %851 = vperm.xlu0 %850, %v631
        %v852 = vpop.permute.xlu0 %851
        %855 = vset.pattern.permute.xlu0 0
        %856 = vperm.xlu0 %855, %v632
        %v857 = vpop.permute.xlu0 %856
        %860 = vset.pattern.permute.xlu0 0
        %861 = vperm.xlu0 %860, %v633
        %v862 = vpop.permute.xlu0 %861
        %865 = vset.pattern.permute.xlu0 0
        %866 = vperm.xlu0 %865, %v634
        %v867 = vpop.permute.xlu0 %866
        %870 = vset.pattern.permute.xlu0 0
        %871 = vperm.xlu0 %870, %v635
        %v872 = vpop.permute.xlu0 %871
        %875 = vset.pattern.permute.xlu0 0
        %876 = vperm.xlu0 %875, %v636
        %v877 = vpop.permute.xlu0 %876
        %v880 = vperm.slane %v341, 0
        %v882 = vmul.f32 %v802, %v880
        %v883 = vmul.f32 %v807, %v880
        %v884 = vmul.f32 %v812, %v880
        %v885 = vmul.f32 %v817, %v880
        %v886 = vmul.f32 %v822, %v880
        %v887 = vmul.f32 %v827, %v880
        %v888 = vmul.f32 %v832, %v880
        %v889 = vmul.f32 %v837, %v880
        %v890 = vmul.f32 %v842, %v880
        %v891 = vmul.f32 %v847, %v880
        %v892 = vmul.f32 %v852, %v880
        %v893 = vmul.f32 %v857, %v880
        %v894 = vmul.f32 %v862, %v880
        %v895 = vmul.f32 %v867, %v880
        %v896 = vmul.f32 %v872, %v880
        %v897 = vmul.f32 %v877, %v880
        %v898 = vmax.f32 %v882, 1e-08
        %v899 = vmax.f32 %v883, 1e-08
        %v900 = vmax.f32 %v884, 1e-08
        %v901 = vmax.f32 %v885, 1e-08
        %v902 = vmax.f32 %v886, 1e-08
        %v903 = vmax.f32 %v887, 1e-08
        %v904 = vmax.f32 %v888, 1e-08
        %v905 = vmax.f32 %v889, 1e-08
        %v906 = vmax.f32 %v890, 1e-08
        %v907 = vmax.f32 %v891, 1e-08
        %v908 = vmax.f32 %v892, 1e-08
        %v909 = vmax.f32 %v893, 1e-08
        %v910 = vmax.f32 %v894, 1e-08
        %v911 = vmax.f32 %v895, 1e-08
        %v912 = vmax.f32 %v896, 1e-08
        %v913 = vmax.f32 %v897, 1e-08
        %v914 = vrcp.pop %v898
        %v915 = vrcp.pop %v899
        %v916 = vrcp.pop %v900
        %v917 = vrcp.pop %v901
        %v918 = vrcp.pop %v902
        %v919 = vrcp.pop %v903
        %v920 = vrcp.pop %v904
        %v921 = vrcp.pop %v905
        %v922 = vrcp.pop %v906
        %v923 = vrcp.pop %v907
        %v924 = vrcp.pop %v908
        %v925 = vrcp.pop %v909
        %v926 = vrcp.pop %v910
        %v927 = vrcp.pop %v911
        %v928 = vrcp.pop %v912
        %v929 = vrcp.pop %v913
        %v930 = vmul.f32 %v752, %v914
        %v931 = vmul.f32 %v755, %v915
        %v932 = vmul.f32 %v758, %v916
        %v933 = vmul.f32 %v761, %v917
        %v934 = vmul.f32 %v764, %v918
        %v935 = vmul.f32 %v767, %v919
        %v936 = vmul.f32 %v770, %v920
        %v937 = vmul.f32 %v773, %v921
        %v938 = vmul.f32 %v776, %v922
        %v939 = vmul.f32 %v779, %v923
        %v940 = vmul.f32 %v782, %v924
        %v941 = vmul.f32 %v785, %v925
        %v942 = vmul.f32 %v788, %v926
        %v943 = vmul.f32 %v791, %v927
        %v944 = vmul.f32 %v794, %v928
        %v945 = vmul.f32 %v797, %v929
        %946 = vst [vmem:[%s275] sm:$0xff] %v930
        %947 = vst [vmem:[%s275 + $0x8] sm:$0xff] %v931
        %948 = vst [vmem:[%s275 + $0x10] sm:$0xff] %v932
        %949 = vst [vmem:[%s275 + $0x18] sm:$0xff] %v933
        %950 = vst [vmem:[%s275 + $0x20] sm:$0xff] %v934
        %951 = vst [vmem:[%s275 + $0x28] sm:$0xff] %v935
        %952 = vst [vmem:[%s275 + $0x30] sm:$0xff] %v936
        %953 = vst [vmem:[%s275 + $0x38] sm:$0xff] %v937
        %954 = vst [vmem:[%s275 + $0x40] sm:$0xff] %v938
        %955 = vst [vmem:[%s275 + $0x48] sm:$0xff] %v939
        %956 = vst [vmem:[%s275 + $0x50] sm:$0xff] %v940
        %957 = vst [vmem:[%s275 + $0x58] sm:$0xff] %v941
        %958 = vst [vmem:[%s275 + $0x60] sm:$0xff] %v942
        %959 = vst [vmem:[%s275 + $0x68] sm:$0xff] %v943
        %960 = vst [vmem:[%s275 + $0x70] sm:$0xff] %v944
        %961 = vst [vmem:[%s275 + $0x78] sm:$0xff] %v945
        %s962 = smul.u32 %s29, 128
        %v963 = vlaneseq
        %v964 = vand.u32 %v963, 127
        %v965 = vstv %s962
        %v966 = vadd.s32 %v965, %v964
        %vm967 = vcmp.lt.s32.totalorder %v966, 16
        %v968 = vsel %vm967, %v930, -inf
        %v969 = vsel %vm967, %v931, -inf
        %v970 = vsel %vm967, %v932, -inf
        %v971 = vsel %vm967, %v933, -inf
        %v972 = vsel %vm967, %v934, -inf
        %v973 = vsel %vm967, %v935, -inf
        %v974 = vsel %vm967, %v936, -inf
        %v975 = vsel %vm967, %v937, -inf
        %v976 = vsel %vm967, %v938, -inf
        %v977 = vsel %vm967, %v939, -inf
        %v978 = vsel %vm967, %v940, -inf
        %v979 = vsel %vm967, %v941, -inf
        %v980 = vsel %vm967, %v942, -inf
        %v981 = vsel %vm967, %v943, -inf
        %v982 = vsel %vm967, %v944, -inf
        %v983 = vsel %vm967, %v945, -inf
        %984 = vmax.xlane.f32.xlu0 %v968
        %v985 = vpop.xlane.xlu0 %984
        %986 = vmax.xlane.f32.xlu0 %v969
        %v987 = vpop.xlane.xlu0 %986
        %988 = vmax.xlane.f32.xlu0 %v970
        %v989 = vpop.xlane.xlu0 %988
        %990 = vmax.xlane.f32.xlu0 %v971
        %v991 = vpop.xlane.xlu0 %990
        %992 = vmax.xlane.f32.xlu0 %v972
        %v993 = vpop.xlane.xlu0 %992
        %994 = vmax.xlane.f32.xlu0 %v973
        %v995 = vpop.xlane.xlu0 %994
        %996 = vmax.xlane.f32.xlu0 %v974
        %v997 = vpop.xlane.xlu0 %996
        %998 = vmax.xlane.f32.xlu0 %v975
        %v999 = vpop.xlane.xlu0 %998
        %1000 = vmax.xlane.f32.xlu0 %v976
        %v1001 = vpop.xlane.xlu0 %1000
        %1002 = vmax.xlane.f32.xlu0 %v977
        %v1003 = vpop.xlane.xlu0 %1002
        %1004 = vmax.xlane.f32.xlu0 %v978
        %v1005 = vpop.xlane.xlu0 %1004
        %1006 = vmax.xlane.f32.xlu0 %v979
        %v1007 = vpop.xlane.xlu0 %1006
        %1008 = vmax.xlane.f32.xlu0 %v980
        %v1009 = vpop.xlane.xlu0 %1008
        %1010 = vmax.xlane.f32.xlu0 %v981
        %v1011 = vpop.xlane.xlu0 %1010
        %1012 = vmax.xlane.f32.xlu0 %v982
        %v1013 = vpop.xlane.xlu0 %1012
        %1014 = vmax.xlane.f32.xlu0 %v983
        %v1015 = vpop.xlane.xlu0 %1014
        %v1016 = vld [vmem:[#allocation3] sm:$0x1]
        %v1033 = vperm.slane %v985, 0
        %v1034 = vperm.slane %v985, 1
        %v1035 = vperm.slane %v985, 2
        %v1036 = vperm.slane %v985, 3
        %v1037 = vperm.slane %v985, 4
        %v1038 = vperm.slane %v985, 5
        %v1039 = vperm.slane %v985, 6
        %v1040 = vperm.slane %v985, 7
        %v1041 = vperm.slane %v987, 0
        %v1042 = vperm.slane %v987, 1
        %v1043 = vperm.slane %v987, 2
        %v1044 = vperm.slane %v987, 3
        %v1045 = vperm.slane %v987, 4
        %v1046 = vperm.slane %v987, 5
        %v1047 = vperm.slane %v987, 6
        %v1048 = vperm.slane %v987, 7
        %v1049 = vperm.slane %v989, 0
        %v1050 = vperm.slane %v989, 1
        %v1051 = vperm.slane %v989, 2
        %v1052 = vperm.slane %v989, 3
        %v1053 = vperm.slane %v989, 4
        %v1054 = vperm.slane %v989, 5
        %v1055 = vperm.slane %v989, 6
        %v1056 = vperm.slane %v989, 7
        %v1057 = vperm.slane %v991, 0
        %v1058 = vperm.slane %v991, 1
        %v1059 = vperm.slane %v991, 2
        %v1060 = vperm.slane %v991, 3
        %v1061 = vperm.slane %v991, 4
        %v1062 = vperm.slane %v991, 5
        %v1063 = vperm.slane %v991, 6
        %v1064 = vperm.slane %v991, 7
        %v1065 = vperm.slane %v993, 0
        %v1066 = vperm.slane %v993, 1
        %v1067 = vperm.slane %v993, 2
        %v1068 = vperm.slane %v993, 3
        %v1069 = vperm.slane %v993, 4
        %v1070 = vperm.slane %v993, 5
        %v1071 = vperm.slane %v993, 6
        %v1072 = vperm.slane %v993, 7
        %v1073 = vperm.slane %v995, 0
        %v1074 = vperm.slane %v995, 1
        %v1075 = vperm.slane %v995, 2
        %v1076 = vperm.slane %v995, 3
        %v1077 = vperm.slane %v995, 4
        %v1078 = vperm.slane %v995, 5
        %v1079 = vperm.slane %v995, 6
        %v1080 = vperm.slane %v995, 7
        %v1081 = vperm.slane %v997, 0
        %v1082 = vperm.slane %v997, 1
        %v1083 = vperm.slane %v997, 2
        %v1084 = vperm.slane %v997, 3
        %v1085 = vperm.slane %v997, 4
        %v1086 = vperm.slane %v997, 5
        %v1087 = vperm.slane %v997, 6
        %v1088 = vperm.slane %v997, 7
        %v1089 = vperm.slane %v999, 0
        %v1090 = vperm.slane %v999, 1
        %v1091 = vperm.slane %v999, 2
        %v1092 = vperm.slane %v999, 3
        %v1093 = vperm.slane %v999, 4
        %v1094 = vperm.slane %v999, 5
        %v1095 = vperm.slane %v999, 6
        %v1096 = vperm.slane %v999, 7
        %v1097 = vperm.slane %v1001, 0
        %v1098 = vperm.slane %v1001, 1
        %v1099 = vperm.slane %v1001, 2
        %v1100 = vperm.slane %v1001, 3
        %v1101 = vperm.slane %v1001, 4
        %v1102 = vperm.slane %v1001, 5
        %v1103 = vperm.slane %v1001, 6
        %v1104 = vperm.slane %v1001, 7
        %v1105 = vperm.slane %v1003, 0
        %v1106 = vperm.slane %v1003, 1
        %v1107 = vperm.slane %v1003, 2
        %v1108 = vperm.slane %v1003, 3
        %v1109 = vperm.slane %v1003, 4
        %v1110 = vperm.slane %v1003, 5
        %v1111 = vperm.slane %v1003, 6
        %v1112 = vperm.slane %v1003, 7
        %v1113 = vperm.slane %v1005, 0
        %v1114 = vperm.slane %v1005, 1
        %v1115 = vperm.slane %v1005, 2
        %v1116 = vperm.slane %v1005, 3
        %v1117 = vperm.slane %v1005, 4
        %v1118 = vperm.slane %v1005, 5
        %v1119 = vperm.slane %v1005, 6
        %v1120 = vperm.slane %v1005, 7
        %v1121 = vperm.slane %v1007, 0
        %v1122 = vperm.slane %v1007, 1
        %v1123 = vperm.slane %v1007, 2
        %v1124 = vperm.slane %v1007, 3
        %v1125 = vperm.slane %v1007, 4
        %v1126 = vperm.slane %v1007, 5
        %v1127 = vperm.slane %v1007, 6
        %v1128 = vperm.slane %v1007, 7
        %v1129 = vperm.slane %v1009, 0
        %v1130 = vperm.slane %v1009, 1
        %v1131 = vperm.slane %v1009, 2
        %v1132 = vperm.slane %v1009, 3
        %v1133 = vperm.slane %v1009, 4
        %v1134 = vperm.slane %v1009, 5
        %v1135 = vperm.slane %v1009, 6
        %v1136 = vperm.slane %v1009, 7
        %v1137 = vperm.slane %v1011, 0
        %v1138 = vperm.slane %v1011, 1
        %v1139 = vperm.slane %v1011, 2
        %v1140 = vperm.slane %v1011, 3
        %v1141 = vperm.slane %v1011, 4
        %v1142 = vperm.slane %v1011, 5
        %v1143 = vperm.slane %v1011, 6
        %v1144 = vperm.slane %v1011, 7
        %v1145 = vperm.slane %v1013, 0
        %v1146 = vperm.slane %v1013, 1
        %v1147 = vperm.slane %v1013, 2
        %v1148 = vperm.slane %v1013, 3
        %v1149 = vperm.slane %v1013, 4
        %v1150 = vperm.slane %v1013, 5
        %v1151 = vperm.slane %v1013, 6
        %v1152 = vperm.slane %v1013, 7
        %v1153 = vperm.slane %v1015, 0
        %v1154 = vperm.slane %v1015, 1
        %v1155 = vperm.slane %v1015, 2
        %v1156 = vperm.slane %v1015, 3
        %v1157 = vperm.slane %v1015, 4
        %v1158 = vperm.slane %v1015, 5
        %v1159 = vperm.slane %v1015, 6
        %v1160 = vperm.slane %v1015, 7
        %1161 = vst [vmem:[#allocation1] ss:$9 sm:$0xff] %v1033
        %s1162 = scalar_lea.vmem [#allocation1], 1
        %1163 = vst [vmem:[%s1162] ss:$9 sm:$0xff] %v1034
        %s1164 = scalar_lea.vmem [#allocation1], 2
        %1165 = vst [vmem:[%s1164] ss:$9 sm:$0xff] %v1035
        %s1166 = scalar_lea.vmem [#allocation1], 3
        %1167 = vst [vmem:[%s1166] ss:$9 sm:$0xff] %v1036
        %s1168 = scalar_lea.vmem [#allocation1], 4
        %1169 = vst [vmem:[%s1168] ss:$9 sm:$0xff] %v1037
        %s1170 = scalar_lea.vmem [#allocation1], 5
        %1171 = vst [vmem:[%s1170] ss:$9 sm:$0xff] %v1038
        %s1172 = scalar_lea.vmem [#allocation1], 6
        %1173 = vst [vmem:[%s1172] ss:$9 sm:$0xff] %v1039
        %s1174 = scalar_lea.vmem [#allocation1], 7
        %1175 = vst [vmem:[%s1174] ss:$9 sm:$0xff] %v1040
        %v1176 = vld [vmem:[#allocation1] sm:$0xff]
        %1177 = vst [vmem:[#allocation1] ss:$9 sm:$0xff] %v1041
        %1178 = vst [vmem:[%s1162] ss:$9 sm:$0xff] %v1042
        %1179 = vst [vmem:[%s1164] ss:$9 sm:$0xff] %v1043
        %1180 = vst [vmem:[%s1166] ss:$9 sm:$0xff] %v1044
        %1181 = vst [vmem:[%s1168] ss:$9 sm:$0xff] %v1045
        %1182 = vst [vmem:[%s1170] ss:$9 sm:$0xff] %v1046
        %1183 = vst [vmem:[%s1172] ss:$9 sm:$0xff] %v1047
        %1184 = vst [vmem:[%s1174] ss:$9 sm:$0xff] %v1048
        %v1185 = vld [vmem:[#allocation1] sm:$0xff]
        %1186 = vst [vmem:[#allocation1] ss:$9 sm:$0xff] %v1049
        %1187 = vst [vmem:[%s1162] ss:$9 sm:$0xff] %v1050
        %1188 = vst [vmem:[%s1164] ss:$9 sm:$0xff] %v1051
        %1189 = vst [vmem:[%s1166] ss:$9 sm:$0xff] %v1052
        %1190 = vst [vmem:[%s1168] ss:$9 sm:$0xff] %v1053
        %1191 = vst [vmem:[%s1170] ss:$9 sm:$0xff] %v1054
        %1192 = vst [vmem:[%s1172] ss:$9 sm:$0xff] %v1055
        %1193 = vst [vmem:[%s1174] ss:$9 sm:$0xff] %v1056
        %v1194 = vld [vmem:[#allocation1] sm:$0xff]
        %1195 = vst [vmem:[#allocation1] ss:$9 sm:$0xff] %v1057
        %1196 = vst [vmem:[%s1162] ss:$9 sm:$0xff] %v1058
        %1197 = vst [vmem:[%s1164] ss:$9 sm:$0xff] %v1059
        %1198 = vst [vmem:[%s1166] ss:$9 sm:$0xff] %v1060
        %1199 = vst [vmem:[%s1168] ss:$9 sm:$0xff] %v1061
        %1200 = vst [vmem:[%s1170] ss:$9 sm:$0xff] %v1062
        %1201 = vst [vmem:[%s1172] ss:$9 sm:$0xff] %v1063
        %1202 = vst [vmem:[%s1174] ss:$9 sm:$0xff] %v1064
        %v1203 = vld [vmem:[#allocation1] sm:$0xff]
        %1204 = vst [vmem:[#allocation1] ss:$9 sm:$0xff] %v1065
        %1205 = vst [vmem:[%s1162] ss:$9 sm:$0xff] %v1066
        %1206 = vst [vmem:[%s1164] ss:$9 sm:$0xff] %v1067
        %1207 = vst [vmem:[%s1166] ss:$9 sm:$0xff] %v1068
        %1208 = vst [vmem:[%s1168] ss:$9 sm:$0xff] %v1069
        %1209 = vst [vmem:[%s1170] ss:$9 sm:$0xff] %v1070
        %1210 = vst [vmem:[%s1172] ss:$9 sm:$0xff] %v1071
        %1211 = vst [vmem:[%s1174] ss:$9 sm:$0xff] %v1072
        %v1212 = vld [vmem:[#allocation1] sm:$0xff]
        %1213 = vst [vmem:[#allocation1] ss:$9 sm:$0xff] %v1073
        %1214 = vst [vmem:[%s1162] ss:$9 sm:$0xff] %v1074
        %1215 = vst [vmem:[%s1164] ss:$9 sm:$0xff] %v1075
        %1216 = vst [vmem:[%s1166] ss:$9 sm:$0xff] %v1076
        %1217 = vst [vmem:[%s1168] ss:$9 sm:$0xff] %v1077
        %1218 = vst [vmem:[%s1170] ss:$9 sm:$0xff] %v1078
        %1219 = vst [vmem:[%s1172] ss:$9 sm:$0xff] %v1079
        %1220 = vst [vmem:[%s1174] ss:$9 sm:$0xff] %v1080
        %v1221 = vld [vmem:[#allocation1] sm:$0xff]
        %1222 = vst [vmem:[#allocation1] ss:$9 sm:$0xff] %v1081
        %1223 = vst [vmem:[%s1162] ss:$9 sm:$0xff] %v1082
        %1224 = vst [vmem:[%s1164] ss:$9 sm:$0xff] %v1083
        %1225 = vst [vmem:[%s1166] ss:$9 sm:$0xff] %v1084
        %1226 = vst [vmem:[%s1168] ss:$9 sm:$0xff] %v1085
        %1227 = vst [vmem:[%s1170] ss:$9 sm:$0xff] %v1086
        %1228 = vst [vmem:[%s1172] ss:$9 sm:$0xff] %v1087
        %1229 = vst [vmem:[%s1174] ss:$9 sm:$0xff] %v1088
        %v1230 = vld [vmem:[#allocation1] sm:$0xff]
        %1231 = vst [vmem:[#allocation1] ss:$9 sm:$0xff] %v1089
        %1232 = vst [vmem:[%s1162] ss:$9 sm:$0xff] %v1090
        %1233 = vst [vmem:[%s1164] ss:$9 sm:$0xff] %v1091
        %1234 = vst [vmem:[%s1166] ss:$9 sm:$0xff] %v1092
        %1235 = vst [vmem:[%s1168] ss:$9 sm:$0xff] %v1093
        %1236 = vst [vmem:[%s1170] ss:$9 sm:$0xff] %v1094
        %1237 = vst [vmem:[%s1172] ss:$9 sm:$0xff] %v1095
        %1238 = vst [vmem:[%s1174] ss:$9 sm:$0xff] %v1096
        %v1239 = vld [vmem:[#allocation1] sm:$0xff]
        %1240 = vst [vmem:[#allocation1] ss:$9 sm:$0xff] %v1097
        %1241 = vst [vmem:[%s1162] ss:$9 sm:$0xff] %v1098
        %1242 = vst [vmem:[%s1164] ss:$9 sm:$0xff] %v1099
        %1243 = vst [vmem:[%s1166] ss:$9 sm:$0xff] %v1100
        %1244 = vst [vmem:[%s1168] ss:$9 sm:$0xff] %v1101
        %1245 = vst [vmem:[%s1170] ss:$9 sm:$0xff] %v1102
        %1246 = vst [vmem:[%s1172] ss:$9 sm:$0xff] %v1103
        %1247 = vst [vmem:[%s1174] ss:$9 sm:$0xff] %v1104
        %v1248 = vld [vmem:[#allocation1] sm:$0xff]
        %1249 = vst [vmem:[#allocation1] ss:$9 sm:$0xff] %v1105
        %1250 = vst [vmem:[%s1162] ss:$9 sm:$0xff] %v1106
        %1251 = vst [vmem:[%s1164] ss:$9 sm:$0xff] %v1107
        %1252 = vst [vmem:[%s1166] ss:$9 sm:$0xff] %v1108
        %1253 = vst [vmem:[%s1168] ss:$9 sm:$0xff] %v1109
        %1254 = vst [vmem:[%s1170] ss:$9 sm:$0xff] %v1110
        %1255 = vst [vmem:[%s1172] ss:$9 sm:$0xff] %v1111
        %1256 = vst [vmem:[%s1174] ss:$9 sm:$0xff] %v1112
        %v1257 = vld [vmem:[#allocation1] sm:$0xff]
        %1258 = vst [vmem:[#allocation1] ss:$9 sm:$0xff] %v1113
        %1259 = vst [vmem:[%s1162] ss:$9 sm:$0xff] %v1114
        %1260 = vst [vmem:[%s1164] ss:$9 sm:$0xff] %v1115
        %1261 = vst [vmem:[%s1166] ss:$9 sm:$0xff] %v1116
        %1262 = vst [vmem:[%s1168] ss:$9 sm:$0xff] %v1117
        %1263 = vst [vmem:[%s1170] ss:$9 sm:$0xff] %v1118
        %1264 = vst [vmem:[%s1172] ss:$9 sm:$0xff] %v1119
        %1265 = vst [vmem:[%s1174] ss:$9 sm:$0xff] %v1120
        %v1266 = vld [vmem:[#allocation1] sm:$0xff]
        %1267 = vst [vmem:[#allocation1] ss:$9 sm:$0xff] %v1121
        %1268 = vst [vmem:[%s1162] ss:$9 sm:$0xff] %v1122
        %1269 = vst [vmem:[%s1164] ss:$9 sm:$0xff] %v1123
        %1270 = vst [vmem:[%s1166] ss:$9 sm:$0xff] %v1124
        %1271 = vst [vmem:[%s1168] ss:$9 sm:$0xff] %v1125
        %1272 = vst [vmem:[%s1170] ss:$9 sm:$0xff] %v1126
        %1273 = vst [vmem:[%s1172] ss:$9 sm:$0xff] %v1127
        %1274 = vst [vmem:[%s1174] ss:$9 sm:$0xff] %v1128
        %v1275 = vld [vmem:[#allocation1] sm:$0xff]
        %1276 = vst [vmem:[#allocation1] ss:$9 sm:$0xff] %v1129
        %1277 = vst [vmem:[%s1162] ss:$9 sm:$0xff] %v1130
        %1278 = vst [vmem:[%s1164] ss:$9 sm:$0xff] %v1131
        %1279 = vst [vmem:[%s1166] ss:$9 sm:$0xff] %v1132
        %1280 = vst [vmem:[%s1168] ss:$9 sm:$0xff] %v1133
        %1281 = vst [vmem:[%s1170] ss:$9 sm:$0xff] %v1134
        %1282 = vst [vmem:[%s1172] ss:$9 sm:$0xff] %v1135
        %1283 = vst [vmem:[%s1174] ss:$9 sm:$0xff] %v1136
        %v1284 = vld [vmem:[#allocation1] sm:$0xff]
        %1285 = vst [vmem:[#allocation1] ss:$9 sm:$0xff] %v1137
        %1286 = vst [vmem:[%s1162] ss:$9 sm:$0xff] %v1138
        %1287 = vst [vmem:[%s1164] ss:$9 sm:$0xff] %v1139
        %1288 = vst [vmem:[%s1166] ss:$9 sm:$0xff] %v1140
        %1289 = vst [vmem:[%s1168] ss:$9 sm:$0xff] %v1141
        %1290 = vst [vmem:[%s1170] ss:$9 sm:$0xff] %v1142
        %1291 = vst [vmem:[%s1172] ss:$9 sm:$0xff] %v1143
        %1292 = vst [vmem:[%s1174] ss:$9 sm:$0xff] %v1144
        %v1293 = vld [vmem:[#allocation1] sm:$0xff]
        %1294 = vst [vmem:[#allocation1] ss:$9 sm:$0xff] %v1145
        %1295 = vst [vmem:[%s1162] ss:$9 sm:$0xff] %v1146
        %1296 = vst [vmem:[%s1164] ss:$9 sm:$0xff] %v1147
        %1297 = vst [vmem:[%s1166] ss:$9 sm:$0xff] %v1148
        %1298 = vst [vmem:[%s1168] ss:$9 sm:$0xff] %v1149
        %1299 = vst [vmem:[%s1170] ss:$9 sm:$0xff] %v1150
        %1300 = vst [vmem:[%s1172] ss:$9 sm:$0xff] %v1151
        %1301 = vst [vmem:[%s1174] ss:$9 sm:$0xff] %v1152
        %v1302 = vld [vmem:[#allocation1] sm:$0xff]
        %1303 = vst [vmem:[#allocation1] ss:$9 sm:$0xff] %v1153
        %1304 = vst [vmem:[%s1162] ss:$9 sm:$0xff] %v1154
        %1305 = vst [vmem:[%s1164] ss:$9 sm:$0xff] %v1155
        %1306 = vst [vmem:[%s1166] ss:$9 sm:$0xff] %v1156
        %1307 = vst [vmem:[%s1168] ss:$9 sm:$0xff] %v1157
        %1308 = vst [vmem:[%s1170] ss:$9 sm:$0xff] %v1158
        %1309 = vst [vmem:[%s1172] ss:$9 sm:$0xff] %v1159
        %1310 = vst [vmem:[%s1174] ss:$9 sm:$0xff] %v1160
        %v1311 = vld [vmem:[#allocation1] sm:$0xff]
        %1312 = vset.pattern.permute.xlu0 0
        %1313 = vperm.xlu0 %1312, %v1176
        %v1314 = vpop.permute.xlu0 %1313
        %1315 = vset.pattern.permute.xlu0 0
        %1316 = vperm.xlu0 %1315, %v1185
        %v1317 = vpop.permute.xlu0 %1316
        %1318 = vset.pattern.permute.xlu0 0
        %1319 = vperm.xlu0 %1318, %v1194
        %v1320 = vpop.permute.xlu0 %1319
        %1321 = vset.pattern.permute.xlu0 0
        %1322 = vperm.xlu0 %1321, %v1203
        %v1323 = vpop.permute.xlu0 %1322
        %1324 = vset.pattern.permute.xlu0 0
        %1325 = vperm.xlu0 %1324, %v1212
        %v1326 = vpop.permute.xlu0 %1325
        %1327 = vset.pattern.permute.xlu0 0
        %1328 = vperm.xlu0 %1327, %v1221
        %v1329 = vpop.permute.xlu0 %1328
        %1330 = vset.pattern.permute.xlu0 0
        %1331 = vperm.xlu0 %1330, %v1230
        %v1332 = vpop.permute.xlu0 %1331
        %1333 = vset.pattern.permute.xlu0 0
        %1334 = vperm.xlu0 %1333, %v1239
        %v1335 = vpop.permute.xlu0 %1334
        %1336 = vset.pattern.permute.xlu0 0
        %1337 = vperm.xlu0 %1336, %v1248
        %v1338 = vpop.permute.xlu0 %1337
        %1339 = vset.pattern.permute.xlu0 0
        %1340 = vperm.xlu0 %1339, %v1257
        %v1341 = vpop.permute.xlu0 %1340
        %1342 = vset.pattern.permute.xlu0 0
        %1343 = vperm.xlu0 %1342, %v1266
        %v1344 = vpop.permute.xlu0 %1343
        %1345 = vset.pattern.permute.xlu0 0
        %1346 = vperm.xlu0 %1345, %v1275
        %v1347 = vpop.permute.xlu0 %1346
        %1348 = vset.pattern.permute.xlu0 0
        %1349 = vperm.xlu0 %1348, %v1284
        %v1350 = vpop.permute.xlu0 %1349
        %1351 = vset.pattern.permute.xlu0 0
        %1352 = vperm.xlu0 %1351, %v1293
        %v1353 = vpop.permute.xlu0 %1352
        %1354 = vset.pattern.permute.xlu0 0
        %1355 = vperm.xlu0 %1354, %v1302
        %v1356 = vpop.permute.xlu0 %1355
        %1357 = vset.pattern.permute.xlu0 0
        %1358 = vperm.xlu0 %1357, %v1311
        %v1359 = vpop.permute.xlu0 %1358
        %v1360 = vperm.slane %v1314, %v964
        %v1361 = vadd.s32 %v964, 4294967288
        %v1362 = vperm.slane %v1317, %v1361
        %vm1363 = vcmask 130112
        %v1364 = vsel %vm1363, %v1362, %v1360
        %v1365 = vadd.s32 %v964, 4294967280
        %v1366 = vperm.slane %v1320, %v1365
        %vm1367 = vcmask 195712
        %v1368 = vsel %vm1367, %v1366, %v1364
        %v1369 = vadd.s32 %v964, 4294967272
        %v1370 = vperm.slane %v1323, %v1369
        %vm1371 = vcmask 261312
        %v1372 = vsel %vm1371, %v1370, %v1368
        %v1373 = vadd.s32 %v964, 4294967264
        %v1374 = vperm.slane %v1326, %v1373
        %vm1375 = vcmask 326912
        %v1376 = vsel %vm1375, %v1374, %v1372
        %v1377 = vadd.s32 %v964, 4294967256
        %v1378 = vperm.slane %v1329, %v1377
        %vm1379 = vcmask 392512
        %v1380 = vsel %vm1379, %v1378, %v1376
        %v1381 = vadd.s32 %v964, 4294967248
        %v1382 = vperm.slane %v1332, %v1381
        %vm1383 = vcmask 458112
        %v1384 = vsel %vm1383, %v1382, %v1380
        %v1385 = vadd.s32 %v964, 4294967240
        %v1386 = vperm.slane %v1335, %v1385
        %vm1387 = vcmask 523712
        %v1388 = vsel %vm1387, %v1386, %v1384
        %v1389 = vadd.s32 %v964, 4294967232
        %v1390 = vperm.slane %v1338, %v1389
        %vm1391 = vcmask 589312
        %v1392 = vsel %vm1391, %v1390, %v1388
        %v1393 = vadd.s32 %v964, 4294967224
        %v1394 = vperm.slane %v1341, %v1393
        %vm1395 = vcmask 654912
        %v1396 = vsel %vm1395, %v1394, %v1392
        %v1397 = vadd.s32 %v964, 4294967216
        %v1398 = vperm.slane %v1344, %v1397
        %vm1399 = vcmask 720512
        %v1400 = vsel %vm1399, %v1398, %v1396
        %v1401 = vadd.s32 %v964, 4294967208
        %v1402 = vperm.slane %v1347, %v1401
        %vm1403 = vcmask 786112
        %v1404 = vsel %vm1403, %v1402, %v1400
        %v1405 = vadd.s32 %v964, 4294967200
        %v1406 = vperm.slane %v1350, %v1405
        %vm1407 = vcmask 851712
        %v1408 = vsel %vm1407, %v1406, %v1404
        %v1409 = vadd.s32 %v964, 4294967192
        %v1410 = vperm.slane %v1353, %v1409
        %vm1411 = vcmask 917312
        %v1412 = vsel %vm1411, %v1410, %v1408
        %v1413 = vadd.s32 %v964, 4294967184
        %v1414 = vperm.slane %v1356, %v1413
        %vm1415 = vcmask 982912
        %v1416 = vsel %vm1415, %v1414, %v1412
        %v1417 = vadd.s32 %v964, 4294967176
        %v1418 = vperm.slane %v1359, %v1417
        %vm1419 = vcmask 1048512
        %v1420 = vsel %vm1419, %v1418, %v1416
        %v1422 = vmax.f32 %v1016, %v1420
        %1423 = vst [vmem:[#allocation3] sm:$0x1] %v1422
        // Predicated region
        $region37: #{tpu_custom_call.1} parent=31 // pred_check
          %p1424 = pneg %p342
        $region38: #{tpu_custom_call.1} parent=31 // pred_check_branch
          %1426 = sbr.rel (%p1424) target = $region40
        $region39: #{tpu_custom_call.1} parent=31 // pred_region
          %v1427 = vld [vmem:[#allocation3] sm:$0x1]
          %1428 = vst [vmem:[%s281] sm:$0x1] %v1427
        $region40: #{tpu_custom_call.1} parent=31 // pred_fallthru
          _
        %s1429 = sand.u32 %s137, 1
        %s1430 = scalar_lea.sflag [#allocation5], %s1429
        %s1431 = sand.u32 %s137, 1
        %s1432 = smul.addr %s1431, 128
        %s1433 = scalar_lea.vmem [#allocation4], %s1432
        %s1434 = sand.u32 %s165, 1
        %s1435 = scalar_lea.sflag [#allocation7], %s1434
        %s1436 = sand.u32 %s165, 1
        %s1437 = scalar_lea.vmem [#allocation6], %s1436
        // Predicated region
        $region41: #{tpu_custom_call.1} parent=31 // pred_check
          %p1438 = pneg %p147
        $region42: #{tpu_custom_call.1} parent=31 // pred_check_branch
          %1440 = sbr.rel (%p1438) target = $region44
        $region43: #{tpu_custom_call.1} parent=31 // pred_region
          %s1441 = smul.u32 16, %s28
          %1443 = vsyncadd %s1430, 0
          %s1444 = sadd.s32 %s29, %s1441
          %s1445 = smul.addr %s27, 16
          %s1446 = sadd.s32 %s1444, %s1445
          %s1447 = smul.addr %s1446, 8
          %s1448 = scalar_lea.hbm %s3, %s1447
          %s1449 = sshll.u32 %s1433, 4
          %s1450 = int_to_ptr.vmem [resolvable:$true] %s1449
          %s1451 = sshll.u32 %s1448, 4
          %s1452 = int_to_ptr.hbm [resolvable:$true] %s1451
          %1457 = dma.vmem_to_hbm [thread:$0]  %s1450, 2048, %s1452, %s1430, 128, 128, 8
        $region44: #{tpu_custom_call.1} parent=31 // pred_fallthru
          _
        // Predicated region
        $region45: #{tpu_custom_call.1} parent=31 // pred_check
          %p1458 = pneg %p175
        $region46: #{tpu_custom_call.1} parent=31 // pred_check_branch
          %1460 = sbr.rel (%p1458) target = $region48
        $region47: #{tpu_custom_call.1} parent=31 // pred_region
          %1462 = vsyncadd %s1435, 0
          %s1463 = sadd.s32 %s28, %s27
          %s1464 = scalar_lea.hbm %s4, %s1463
          %s1466 = sshll.u32 %s1437, 4
          %s1467 = int_to_ptr.vmem [resolvable:$true] %s1466
          %s1468 = sshll.u32 %s1464, 4
          %s1469 = int_to_ptr.hbm [resolvable:$true] %s1468
          %1471 = dma.vmem_to_hbm [thread:$0]  %s1467, 16, %s1469, %s1435
        $region48: #{tpu_custom_call.1} parent=31 // pred_fallthru
          _
      $region32: #{tpu_custom_call.1} parent=5 // pred_fallthru
        _
      %p1472 = scmp.le.s32.totalorder 2, %s17
      // Predicated region
      $region49: #{tpu_custom_call.1} parent=5 // pred_check
        %p1473 = pneg %p1472
      $region50: #{tpu_custom_call.1} parent=5 // pred_check_branch
        %1475 = sbr.rel (%p1473) target = $region52
      $region51: #{tpu_custom_call.1} parent=5 // pred_region
        %s1476 = ssub.s32 %s17, 2
        // Predicated region
        $region53: #{tpu_custom_call.1} parent=51 // pred_check
          %p1477 = pneg %p153
        $region54: #{tpu_custom_call.1} parent=51 // pred_check_branch
          %1479 = sbr.rel (%p1477) target = $region56
        $region55: #{tpu_custom_call.1} parent=51 // pred_region
          %s1480 = sand.u32 %s138, 1
          %s1481 = scalar_lea.sflag [#allocation5], %s1480
          %s1482 = sand.u32 %s138, 1
          %s1483 = smul.addr %s1482, 128
          %s1484 = scalar_lea.vmem [#allocation4], %s1483
          %1486 = dma.done %s1481, 2048
        $region56: #{tpu_custom_call.1} parent=51 // pred_fallthru
          _
        // Predicated region
        $region57: #{tpu_custom_call.1} parent=51 // pred_check
          %p1487 = pneg %p181
        $region58: #{tpu_custom_call.1} parent=51 // pred_check_branch
          %1489 = sbr.rel (%p1487) target = $region60
        $region59: #{tpu_custom_call.1} parent=51 // pred_region
          %s1490 = sand.u32 %s166, 1
          %s1491 = scalar_lea.sflag [#allocation7], %s1490
          %s1492 = sand.u32 %s166, 1
          %s1493 = scalar_lea.vmem [#allocation6], %s1492
          %1495 = dma.done %s1491, 16
        $region60: #{tpu_custom_call.1} parent=51 // pred_fallthru
          _
      $region52: #{tpu_custom_call.1} parent=5 // pred_fallthru
        _
    $region6: #{tpu_custom_call.1} parent=1 // loop_footer
      %s21 = sadd.s32 1, %s17
    $region7: #{tpu_custom_call.1} parent=1 // loop_footer_branch
      %16 = sbr.rel target = $region3
    $region8: #{tpu_custom_call.1} parent=1 // loop_exit
      _
    %1496 = vsyncpa [#allocation5], 1
    %s1497 = scalar_lea.sflag [#allocation5], 1
    %1498 = vsyncpa %s1497, 1
    %1499 = vsyncpa [#allocation7], 1
    %s1500 = scalar_lea.sflag [#allocation7], 1
    %1501 = vsyncpa %s1500, 1

</llo_original>
